<compile_context>
chip_gen: v7x
topology: tpu7x:2x2x1
jax: 0.10.0
libtpu: 0.0.40
codegen_flags: <defaults>
</compile_context>

<pallas_src>
import functools

import numpy as np
import jax
import jax.numpy as jnp
from jax.experimental import pallas as pl
from jax.experimental.pallas import tpu as pltpu


# ----------------------------------------------------------------------------
# Deterministic parameter setup
# ----------------------------------------------------------------------------
def _gaussian_1d(window_size: int, sigma: float) -> np.ndarray:
    """1-D factor of the fspecial Gaussian; outer(g,g) equals the normalized
    2-D kernel of _fspecial_gaussian_torch for (11, 1.5) since no tap falls
    below eps*max (the thresholding branch is a no-op for these params)."""
    k = np.arange(window_size, dtype=np.float64) - (window_size - 1.0) / 2.0
    e = np.exp(-(k * k) / (2.0 * sigma * sigma))
    return (e / e.sum()).astype(np.float32)


def _fspecial_gaussian(window_size: int, sigma: float) -> np.ndarray:
    """Exact port of _fspecial_gaussian_torch (filter_type=0); used by the ref."""
    m = n = (window_size - 1.0) / 2.0
    y, x = np.ogrid[-m:m + 1, -n:n + 1]
    g = np.exp(-(x * x + y * y) / (2.0 * sigma * sigma))
    g[g < np.finfo(g.dtype).eps * g.max()] = 0
    s = g.sum()
    if s != 0:
        g /= s
    return g.astype(np.float32)


# ----------------------------------------------------------------------------
# Pallas kernel
# ----------------------------------------------------------------------------
def _ssim_kernel(x_ref, y_ref, av_ref, ah_ref, out_ref, *,
                 bt, ho, wo, ho_p, tw, tw_in, n_wt, wp2, c1, c2, data_range):
    # x_ref / y_ref : (bt, H, Wp2) f32, original [0,1] data, zero-padded cols.
    # av_ref        : (Ho_p, H)      banded vertical-tap matrix (rows >= Ho are 0).
    # ah_ref        : (TW+128, TW)   banded horizontal-tap matrix (one column tile).
    a_v = av_ref[...]
    a_h = ah_ref[...]
    inv_count = 1.0 / float(ho * wo)
    row_i = jax.lax.broadcasted_iota(jnp.int32, (ho_p, tw), 0)
    col_i = jax.lax.broadcasted_iota(jnp.int32, (ho_p, tw), 1)

    for b in range(bt):                          # images packed into this block
        x = jnp.round(x_ref[b] * data_range)     # round(x*255) in-kernel
        y = jnp.round(y_ref[b] * data_range)

        # Vertical pass: one MXU matmul over the 5 column-stacked planes.
        planes = jnp.concatenate([x, y, x * x, y * y, x * y], axis=1)  # (H, 5*Wp2)
        t_all = jnp.dot(a_v, planes, preferred_element_type=jnp.float32)  # (Ho_p, 5*Wp2)

        total = jnp.zeros((1, 1), jnp.float32)
        for j in range(n_wt):                    # column tiles of the output
            off = j * tw
            # Row-stack the 5 vertically filtered planes for this column window
            # (lane-aligned static slices: off and tw_in are multiples of 128).
            s = jnp.concatenate(
                [t_all[:, k * wp2 + off: k * wp2 + off + tw_in] for k in range(5)],
                axis=0)                                         # (5*Ho_p, TW+128)
            m = jnp.dot(s, a_h, preferred_element_type=jnp.float32)  # (5*Ho_p, TW)

            mu1 = m[0 * ho_p:1 * ho_p]
            mu2 = m[1 * ho_p:2 * ho_p]
            sxx = m[2 * ho_p:3 * ho_p]
            syy = m[3 * ho_p:4 * ho_p]
            sxy = m[4 * ho_p:5 * ho_p]

            mu1_sq = mu1 * mu1
            mu2_sq = mu2 * mu2
            mu1_mu2 = mu1 * mu2
            sigma1_sq = sxx - mu1_sq
            sigma2_sq = syy - mu2_sq
            sigma12 = sxy - mu1_mu2

            # Fused single divide; relu only on the cs numerator (cs denominator
            # is strictly positive because c2 = 58.5 dominates cancellation).
            num = (2.0 * mu1_mu2 + c1) * jnp.maximum(2.0 * sigma12 + c2, 0.0)
            den = (mu1_sq + mu2_sq + c1) * (sigma1_sq + sigma2_sq + c2)
            smap = num / den                                    # (Ho_p, TW)

            valid = min(tw, wo - off)                           # static per tile
            mask = (row_i < ho) & (col_i < valid)
            smap = jnp.where(mask, smap, 0.0)
            total = total + jnp.sum(jnp.sum(smap, axis=1, keepdims=True),
                                    axis=0, keepdims=True)      # (1, 1)

        # Lane/sublane-dense (8,128) output tile: broadcast the per-image scalar.
        out_ref[b] = jnp.broadcast_to(total * inv_count, (8, 128))


# ----------------------------------------------------------------------------
# Wrapper: parameter setup, layout plumbing, pallas_call
# ----------------------------------------------------------------------------
def ssim_pallas(raw_nchw, dst_nchw, *, window_size=11, gaussian_sigma=1.5,
                data_range=255.0):
    assert raw_nchw.shape == dst_nchw.shape, "inputs must have identical shapes"
    n, c, h, w = raw_nchw.shape
    assert c == 1, "this kernel implements the single-channel (Y) SSIM path"
    assert h >= window_size and w >= window_size
    data_range = 255.0                            # _ssim_torch forces 255.0

    ho = h - window_size + 1
    wo = w - window_size + 1
    ho_p = ((ho + 7) // 8) * 8                    # sublane-aligned output rows

    # Column tiling of the horizontal pass: 512-wide tiles (multiple of 256 for
    # the 2x256 MXUs on v6e/v7x; also fine on v5e) with a 128-col aligned halo.
    tw = min(512, ((wo + 127) // 128) * 128)
    n_wt = -(-wo // tw)
    tw_in = tw + 128
    wp2 = n_wt * tw + 128                         # padded input width (>= w)
    assert wp2 >= w

    g1 = _gaussian_1d(window_size, gaussian_sigma)

    # Banded constants (shared across all grid steps / column tiles).
    a_v = np.zeros((ho_p, h), np.float32)
    for t in range(window_size):
        a_v[np.arange(ho), np.arange(ho) + t] = g1[t]
    a_h = np.zeros((tw_in, tw), np.float32)
    for t in range(window_size):
        a_h[np.arange(tw) + t, np.arange(tw)] = g1[t]

    c1 = (0.01 * data_range) ** 2
    c2 = (0.03 * data_range) ** 2

    # Images per grid step: amortize per-step overhead / fill MXU tiles for
    # small images, but keep >=2 grid steps when N>=2 (megacore on v7x).
    cap = min(n, 8, max(1, (256 * 256) // (h * w)))
    if n >= 2:
        cap = min(cap, max(1, n // 2))
    bt = 1
    for b in range(cap, 0, -1):
        if n % b == 0:
            bt = b
            break

    # No round/cast pre-pass any more; only a width pad for lane alignment.
    x = raw_nchw.reshape(n, h, w).astype(jnp.float32)
    y = dst_nchw.reshape(n, h, w).astype(jnp.float32)
    if wp2 != w:
        pad = ((0, 0), (0, 0), (0, wp2 - w))
        x = jnp.pad(x, pad)
        y = jnp.pad(y, pad)

    kernel = functools.partial(
        _ssim_kernel, bt=bt, ho=ho, wo=wo, ho_p=ho_p, tw=tw, tw_in=tw_in,
        n_wt=n_wt, wp2=wp2, c1=float(c1), c2=float(c2),
        data_range=float(data_range))

    # Cost / VMEM sizing (banded FLOPs, capped at 64MB so it is valid on v7x).
    flops_per_img = (2 * ho_p * h * 5 * wp2
                     + n_wt * 2 * (5 * ho_p) * tw_in * tw
                     + n_wt * 30 * ho_p * tw)
    flops = int(n * flops_per_img)
    bytes_accessed = int(2 * n * h * wp2 * 4 + (a_v.size + a_h.size) * 4
                         + n * 8 * 128 * 4)
    in_block_bytes = bt * h * wp2 * 4
    tmp_bytes = bt * (5 * h * wp2 * 4 + 5 * ho_p * wp2 * 4) + 12 * 5 * ho_p * tw * 4
    est = (2 * 2 * in_block_bytes + 2 * (a_v.size + a_h.size) * 4
           + tmp_bytes + 2 * bt * 8 * 128 * 4)
    vmem_limit = int(min(max(2 * est, 16 * 2**20), 64 * 2**20))

    a_v_j = jnp.asarray(a_v)
    a_h_j = jnp.asarray(a_h)

    def _call(single_buffer_consts):
        def const_spec(shape):
            idx = lambda i: (0,) * len(shape)
            if single_buffer_consts:
                # Constant blocks are revisited every step; double-buffering
                # them only doubles their VMEM footprint.
                return pl.BlockSpec(shape, idx, pipeline_mode=pl.Buffered(1))
            return pl.BlockSpec(shape, idx)

        return pl.pallas_call(
            kernel,
            out_shape=jax.ShapeDtypeStruct((n, 8, 128), jnp.float32),
            grid=(n // bt,),
            in_specs=[
                pl.BlockSpec((bt, h, wp2), lambda i: (i, 0, 0)),
                pl.BlockSpec((bt, h, wp2), lambda i: (i, 0, 0)),
                const_spec((ho_p, h)),
                const_spec((tw_in, tw)),
            ],
            out_specs=pl.BlockSpec((bt, 8, 128), lambda i: (i, 0, 0)),
            compiler_params=pltpu.CompilerParams(
                dimension_semantics=("parallel",),
                vmem_limit_bytes=vmem_limit),
            cost_estimate=pl.CostEstimate(flops=flops, transcendentals=0,
                                          bytes_accessed=bytes_accessed),
        )(x, y, a_v_j, a_h_j)

    try:
        out = _call(True)
    except Exception:
        # Fallback if this JAX build rejects pipeline_mode=pl.Buffered(1).
        out = _call(False)
    return out[:, 0, 0]                                          # (N,)


# ----------------------------------------------------------------------------
# Pure-JAX reference (same math, via lax.conv with the full 2-D kernel)
# ----------------------------------------------------------------------------
def ssim_ref(raw_nchw, dst_nchw, *, window_size=11, gaussian_sigma=1.5,
             data_range=255.0):
    gauss = jnp.asarray(_fspecial_gaussian(window_size, gaussian_sigma))
    k = gauss.reshape(1, 1, window_size, window_size)
    c1 = (0.01 * data_range) ** 2
    c2 = (0.03 * data_range) ** 2
    x = jnp.round(raw_nchw.astype(jnp.float32) * data_range)
    y = jnp.round(dst_nchw.astype(jnp.float32) * data_range)

    conv = lambda a: jax.lax.conv_general_dilated(
        a, k, window_strides=(1, 1), padding="VALID",
        dimension_numbers=("NCHW", "OIHW", "NCHW"),
        precision=jax.lax.Precision.HIGHEST)

    mu1, mu2 = conv(x), conv(y)
    mu1_sq, mu2_sq, mu1_mu2 = mu1 * mu1, mu2 * mu2, mu1 * mu2
    sigma1_sq = conv(x * x) - mu1_sq
    sigma2_sq = conv(y * y) - mu2_sq
    sigma12 = conv(x * y) - mu1_mu2
    cs_map = jnp.maximum((2 * sigma12 + c2) / (sigma1_sq + sigma2_sq + c2), 0.0)
    ssim_map = (2 * mu1_mu2 + c1) / (mu1_sq + mu2_sq + c1) * cs_map
    return ssim_map.mean(axis=(1, 2, 3))


if __name__ == "__main__":
    key = jax.random.PRNGKey(0)
    k1, k2 = jax.random.split(key)
    N, C, H, W = 2, 1, 16, 16          # single (Y) channel, data range [0, 1]
    raw = jax.random.uniform(k1, (N, C, H, W), dtype=jnp.float32)
    dst = jnp.clip(raw + 0.05 * jax.random.normal(k2, (N, C, H, W),
                                                  dtype=jnp.float32), 0.0, 1.0)

    out = jax.block_until_ready(ssim_pallas(raw, dst))
    ref = jax.block_until_ready(ssim_ref(raw, dst))
    assert out.shape == (N,)
    np.testing.assert_allclose(np.asarray(out), np.asarray(ref),
                               rtol=1e-3, atol=1e-3)
    print("KERNEL_OK")
</pallas_src>

<mosaic_0001>
module attributes {stable_mosaic.version = 11 : i64} {
  func.func @_ssim_kernel(%arg0: i32, %arg1: memref<1x16x256xf32, #tpu.memory_space<vmem>>, %arg2: memref<1x16x256xf32, #tpu.memory_space<vmem>>, %arg3: memref<8x16xf32, #tpu.memory_space<vmem>>, %arg4: memref<256x128xf32, #tpu.memory_space<vmem>>, %arg5: memref<1x8x128xf32, #tpu.memory_space<vmem>>) attributes {dimension_semantics = [#tpu.dimension_semantics<parallel>], iteration_bounds = array<i64: 2>, scalar_prefetch = 0 : i64, scratch_operands = 0 : i64, tpu.core_type = #tpu.core_type<tc>, window_params = [{transform_indices = @transform_0, window_bounds = array<i64: 1, 16, 256>}, {transform_indices = @transform_1, window_bounds = array<i64: 1, 16, 256>}, {pipeline_mode = #tpu.pipeline_mode<synchronous>, transform_indices = @transform_2, window_bounds = array<i64: 8, 16>}, {pipeline_mode = #tpu.pipeline_mode<synchronous>, transform_indices = @transform_3, window_bounds = array<i64: 256, 128>}, {transform_indices = @transform_4, window_bounds = array<i64: 1, 8, 128>}]} {
    %c0 = arith.constant 0 : index
    %c0_0 = arith.constant 0 : index
    %0 = vector.load %arg3[%c0, %c0_0] : memref<8x16xf32, #tpu.memory_space<vmem>>, vector<8x16xf32>
    %c0_1 = arith.constant 0 : index
    %c0_2 = arith.constant 0 : index
    %1 = vector.load %arg4[%c0_1, %c0_2] : memref<256x128xf32, #tpu.memory_space<vmem>>, vector<256x128xf32>
    %2 = tpu.iota {dimensions = array<i32: 0>} : vector<8x128xi32>
    %3 = tpu.iota {dimensions = array<i32: 1>} : vector<8x128xi32>
    %c0_3 = arith.constant 0 : index
    %c0_4 = arith.constant 0 : index
    %c0_5 = arith.constant 0 : index
    %4 = vector.load %arg1[%c0_3, %c0_4, %c0_5] : memref<1x16x256xf32, #tpu.memory_space<vmem>>, vector<1x16x256xf32>
    %5 = vector.shape_cast %4 : vector<1x16x256xf32> to vector<16x256xf32>
    %cst = arith.constant 2.550000e+02 : f32
    %6 = vector.broadcast %cst : f32 to vector<16x256xf32>
    %7 = arith.mulf %5, %6 : vector<16x256xf32>
    %8 = math.roundeven %7 : vector<16x256xf32>
    %c0_6 = arith.constant 0 : index
    %c0_7 = arith.constant 0 : index
    %c0_8 = arith.constant 0 : index
    %9 = vector.load %arg2[%c0_6, %c0_7, %c0_8] : memref<1x16x256xf32, #tpu.memory_space<vmem>>, vector<1x16x256xf32>
    %10 = vector.shape_cast %9 : vector<1x16x256xf32> to vector<16x256xf32>
    %cst_9 = arith.constant 2.550000e+02 : f32
    %11 = vector.broadcast %cst_9 : f32 to vector<16x256xf32>
    %12 = arith.mulf %10, %11 : vector<16x256xf32>
    %13 = math.roundeven %12 : vector<16x256xf32>
    %14 = arith.mulf %8, %8 : vector<16x256xf32>
    %15 = arith.mulf %13, %13 : vector<16x256xf32>
    %16 = arith.mulf %8, %13 : vector<16x256xf32>
    %17 = tpu.concatenate %8, %13, %14, %15, %16 in 1 : vector<16x256xf32>, vector<16x256xf32>, vector<16x256xf32>, vector<16x256xf32>, vector<16x256xf32> -> vector<16x1280xf32>
    %cst_10 = arith.constant dense<0.000000e+00> : vector<8x1280xf32>
    %18 = tpu.matmul %0, %17, %cst_10 {dimension_numbers = #tpu.dot_dimension_numbers<[1], [0], [0], [1], [0, 0, 1, 1], [], []>} : vector<8x16xf32>, vector<16x1280xf32>, vector<8x1280xf32> -> vector<8x1280xf32>
    %cst_11 = arith.constant 0.000000e+00 : f32
    %19 = vector.broadcast %cst_11 : f32 to vector<1x1xf32>
    %20 = vector.extract_strided_slice %18 {offsets = [0, 0], sizes = [8, 256], strides = [1, 1]} : vector<8x1280xf32> to vector<8x256xf32>
    %21 = vector.extract_strided_slice %18 {offsets = [0, 256], sizes = [8, 256], strides = [1, 1]} : vector<8x1280xf32> to vector<8x256xf32>
    %22 = vector.extract_strided_slice %18 {offsets = [0, 512], sizes = [8, 256], strides = [1, 1]} : vector<8x1280xf32> to vector<8x256xf32>
    %23 = vector.extract_strided_slice %18 {offsets = [0, 768], sizes = [8, 256], strides = [1, 1]} : vector<8x1280xf32> to vector<8x256xf32>
    %24 = vector.extract_strided_slice %18 {offsets = [0, 1024], sizes = [8, 256], strides = [1, 1]} : vector<8x1280xf32> to vector<8x256xf32>
    %25 = tpu.concatenate %20, %21, %22, %23, %24 in 0 : vector<8x256xf32>, vector<8x256xf32>, vector<8x256xf32>, vector<8x256xf32>, vector<8x256xf32> -> vector<40x256xf32>
    %cst_12 = arith.constant dense<0.000000e+00> : vector<40x128xf32>
    %26 = tpu.matmul %25, %1, %cst_12 {dimension_numbers = #tpu.dot_dimension_numbers<[1], [0], [0], [1], [0, 0, 1, 1], [], []>} : vector<40x256xf32>, vector<256x128xf32>, vector<40x128xf32> -> vector<40x128xf32>
    %27 = vector.extract_strided_slice %26 {offsets = [0, 0], sizes = [8, 128], strides = [1, 1]} : vector<40x128xf32> to vector<8x128xf32>
    %28 = vector.extract_strided_slice %26 {offsets = [8, 0], sizes = [8, 128], strides = [1, 1]} : vector<40x128xf32> to vector<8x128xf32>
    %29 = vector.extract_strided_slice %26 {offsets = [16, 0], sizes = [8, 128], strides = [1, 1]} : vector<40x128xf32> to vector<8x128xf32>
    %30 = vector.extract_strided_slice %26 {offsets = [24, 0], sizes = [8, 128], strides = [1, 1]} : vector<40x128xf32> to vector<8x128xf32>
    %31 = vector.extract_strided_slice %26 {offsets = [32, 0], sizes = [8, 128], strides = [1, 1]} : vector<40x128xf32> to vector<8x128xf32>
    %32 = arith.mulf %27, %27 : vector<8x128xf32>
    %33 = arith.mulf %28, %28 : vector<8x128xf32>
    %34 = arith.mulf %27, %28 : vector<8x128xf32>
    %35 = arith.subf %29, %32 : vector<8x128xf32>
    %36 = arith.subf %30, %33 : vector<8x128xf32>
    %37 = arith.subf %31, %34 : vector<8x128xf32>
    %cst_13 = arith.constant 2.000000e+00 : f32
    %38 = vector.broadcast %cst_13 : f32 to vector<8x128xf32>
    %39 = arith.mulf %38, %34 : vector<8x128xf32>
    %cst_14 = arith.constant 6.502500e+00 : f32
    %40 = vector.broadcast %cst_14 : f32 to vector<8x128xf32>
    %41 = arith.addf %39, %40 : vector<8x128xf32>
    %cst_15 = arith.constant 2.000000e+00 : f32
    %42 = vector.broadcast %cst_15 : f32 to vector<8x128xf32>
    %43 = arith.mulf %42, %37 : vector<8x128xf32>
    %cst_16 = arith.constant 5.852250e+01 : f32
    %44 = vector.broadcast %cst_16 : f32 to vector<8x128xf32>
    %45 = arith.addf %43, %44 : vector<8x128xf32>
    %cst_17 = arith.constant 0.000000e+00 : f32
    %46 = vector.broadcast %cst_17 : f32 to vector<8x128xf32>
    %47 = arith.maximumf %45, %46 : vector<8x128xf32>
    %48 = arith.mulf %41, %47 : vector<8x128xf32>
    %49 = arith.addf %32, %33 : vector<8x128xf32>
    %cst_18 = arith.constant 6.502500e+00 : f32
    %50 = vector.broadcast %cst_18 : f32 to vector<8x128xf32>
    %51 = arith.addf %49, %50 : vector<8x128xf32>
    %52 = arith.addf %35, %36 : vector<8x128xf32>
    %cst_19 = arith.constant 5.852250e+01 : f32
    %53 = vector.broadcast %cst_19 : f32 to vector<8x128xf32>
    %54 = arith.addf %52, %53 : vector<8x128xf32>
    %55 = arith.mulf %51, %54 : vector<8x128xf32>
    %56 = arith.divf %48, %55 : vector<8x128xf32>
    %c6_i32 = arith.constant 6 : i32
    %57 = vector.broadcast %c6_i32 : i32 to vector<8x128xi32>
    %58 = arith.cmpi slt, %2, %57 : vector<8x128xi32>
    %c6_i32_20 = arith.constant 6 : i32
    %59 = vector.broadcast %c6_i32_20 : i32 to vector<8x128xi32>
    %60 = arith.cmpi slt, %3, %59 : vector<8x128xi32>
    %61 = arith.andi %58, %60 : vector<8x128xi1>
    %cst_21 = arith.constant 0.000000e+00 : f32
    %62 = vector.broadcast %cst_21 : f32 to vector<8x128xf32>
    %63 = arith.select %61, %56, %62 : vector<8x128xi1>, vector<8x128xf32>
    %cst_22 = arith.constant dense<0.000000e+00> : vector<8xf32>
    %64 = vector.multi_reduction <add>, %63, %cst_22 [1] : vector<8x128xf32> to vector<8xf32>
    %65 = vector.shape_cast %64 : vector<8xf32> to vector<8x1xf32>
    %cst_23 = arith.constant dense<0.000000e+00> : vector<1xf32>
    %66 = vector.multi_reduction <add>, %65, %cst_23 [0] : vector<8x1xf32> to vector<1xf32>
    %67 = vector.shape_cast %66 : vector<1xf32> to vector<1x1xf32>
    %68 = arith.addf %19, %67 : vector<1x1xf32>
    %cst_24 = arith.constant 0.027777778 : f32
    %69 = vector.broadcast %cst_24 : f32 to vector<1x1xf32>
    %70 = arith.mulf %68, %69 : vector<1x1xf32>
    %71 = vector.shape_cast %70 : vector<1x1xf32> to vector<1x1xf32>
    %72 = vector.broadcast %71 : vector<1x1xf32> to vector<8x128xf32>
    %c0_25 = arith.constant 0 : index
    %c0_26 = arith.constant 0 : index
    %c0_27 = arith.constant 0 : index
    %73 = vector.load %arg5[%c0_25, %c0_26, %c0_27] : memref<1x8x128xf32, #tpu.memory_space<vmem>>, vector<1x8x128xf32>
    %74 = vector.shape_cast %73 : vector<1x8x128xf32> to vector<8x128xf32>
    %75 = vector.shape_cast %72 : vector<8x128xf32> to vector<1x8x128xf32>
    tpu.vector_store %arg5[%c0_25, %c0_26, %c0_27], %75 {strides = array<i32>} : memref<1x8x128xf32, #tpu.memory_space<vmem>>, vector<1x8x128xf32>,
    return
  }
  func.func @transform_0(%arg0: i32) -> (i32, i32, i32) {
    %c0_i32 = arith.constant 0 : i32
    %c0_i32_0 = arith.constant 0 : i32
    %c0_i32_1 = arith.constant 0 : i32
    return %arg0, %c0_i32, %c0_i32_0 : i32, i32, i32
  }
  func.func @transform_1(%arg0: i32) -> (i32, i32, i32) {
    %c0_i32 = arith.constant 0 : i32
    %c0_i32_0 = arith.constant 0 : i32
    %c0_i32_1 = arith.constant 0 : i32
    return %arg0, %c0_i32, %c0_i32_0 : i32, i32, i32
  }
  func.func @transform_2(%arg0: i32) -> (i32, i32) {
    %c0_i32 = arith.constant 0 : i32
    %c0_i32_0 = arith.constant 0 : i32
    %c0_i32_1 = arith.constant 0 : i32
    return %c0_i32, %c0_i32_0 : i32, i32
  }
  func.func @transform_3(%arg0: i32) -> (i32, i32) {
    %c0_i32 = arith.constant 0 : i32
    %c0_i32_0 = arith.constant 0 : i32
    %c0_i32_1 = arith.constant 0 : i32
    return %c0_i32, %c0_i32_0 : i32, i32
  }
  func.func @transform_4(%arg0: i32) -> (i32, i32, i32) {
    %c0_i32 = arith.constant 0 : i32
    %c0_i32_0 = arith.constant 0 : i32
    %c0_i32_1 = arith.constant 0 : i32
    return %arg0, %c0_i32, %c0_i32_0 : i32, i32, i32
  }
}

module attributes {stable_mosaic.version = 11 : i64} {
  func.func @_ssim_kernel(%arg0: i32, %arg1: memref<1x16x256xf32, #tpu.memory_space<vmem>>, %arg2: memref<1x16x256xf32, #tpu.memory_space<vmem>>, %arg3: memref<8x16xf32, #tpu.memory_space<vmem>>, %arg4: memref<256x128xf32, #tpu.memory_space<vmem>>, %arg5: memref<1x8x128xf32, #tpu.memory_space<vmem>>) attributes {dimension_semantics = [#tpu.dimension_semantics<parallel>], iteration_bounds = array<i64: 2>, scalar_prefetch = 0 : i64, scratch_operands = 0 : i64, tpu.core_type = #tpu.core_type<tc>, window_params = [{transform_indices = @transform_0, window_bounds = array<i64: 1, 16, 256>}, {transform_indices = @transform_1, window_bounds = array<i64: 1, 16, 256>}, {pipeline_mode = #tpu.pipeline_mode<synchronous>, transform_indices = @transform_2, window_bounds = array<i64: 8, 16>}, {pipeline_mode = #tpu.pipeline_mode<synchronous>, transform_indices = @transform_3, window_bounds = array<i64: 256, 128>}, {transform_indices = @transform_4, window_bounds = array<i64: 1, 8, 128>}]} {
    %c0 = arith.constant 0 : index
    %c0_0 = arith.constant 0 : index
    %0 = vector.load %arg3[%c0, %c0_0] : memref<8x16xf32, #tpu.memory_space<vmem>>, vector<8x16xf32>
    %c0_1 = arith.constant 0 : index
    %c0_2 = arith.constant 0 : index
    %1 = vector.load %arg4[%c0_1, %c0_2] : memref<256x128xf32, #tpu.memory_space<vmem>>, vector<256x128xf32>
    %2 = tpu.iota {dimensions = array<i32: 0>} : vector<8x128xi32>
    %3 = tpu.iota {dimensions = array<i32: 1>} : vector<8x128xi32>
    %c0_3 = arith.constant 0 : index
    %c0_4 = arith.constant 0 : index
    %c0_5 = arith.constant 0 : index
    %4 = vector.load %arg1[%c0_3, %c0_4, %c0_5] : memref<1x16x256xf32, #tpu.memory_space<vmem>>, vector<1x16x256xf32>
    %5 = vector.shape_cast %4 : vector<1x16x256xf32> to vector<16x256xf32>
    %cst = arith.constant 2.550000e+02 : f32
    %6 = vector.broadcast %cst : f32 to vector<16x256xf32>
    %7 = arith.mulf %5, %6 : vector<16x256xf32>
    %8 = math.roundeven %7 : vector<16x256xf32>
    %c0_6 = arith.constant 0 : index
    %c0_7 = arith.constant 0 : index
    %c0_8 = arith.constant 0 : index
    %9 = vector.load %arg2[%c0_6, %c0_7, %c0_8] : memref<1x16x256xf32, #tpu.memory_space<vmem>>, vector<1x16x256xf32>
    %10 = vector.shape_cast %9 : vector<1x16x256xf32> to vector<16x256xf32>
    %cst_9 = arith.constant 2.550000e+02 : f32
    %11 = vector.broadcast %cst_9 : f32 to vector<16x256xf32>
    %12 = arith.mulf %10, %11 : vector<16x256xf32>
    %13 = math.roundeven %12 : vector<16x256xf32>
    %14 = arith.mulf %8, %8 : vector<16x256xf32>
    %15 = arith.mulf %13, %13 : vector<16x256xf32>
    %16 = arith.mulf %8, %13 : vector<16x256xf32>
    %17 = tpu.concatenate %8, %13, %14, %15, %16 in 1 : vector<16x256xf32>, vector<16x256xf32>, vector<16x256xf32>, vector<16x256xf32>, vector<16x256xf32> -> vector<16x1280xf32>
    %cst_10 = arith.constant dense<0.000000e+00> : vector<8x1280xf32>
    %18 = tpu.matmul %0, %17, %cst_10 {dimension_numbers = #tpu.dot_dimension_numbers<[1], [0], [0], [1], [0, 0, 1, 1], [], []>} : vector<8x16xf32>, vector<16x1280xf32>, vector<8x1280xf32> -> vector<8x1280xf32>
    %cst_11 = arith.constant 0.000000e+00 : f32
    %19 = vector.broadcast %cst_11 : f32 to vector<1x1xf32>
    %20 = vector.extract_strided_slice %18 {offsets = [0, 0], sizes = [8, 256], strides = [1, 1]} : vector<8x1280xf32> to vector<8x256xf32>
    %21 = vector.extract_strided_slice %18 {offsets = [0, 256], sizes = [8, 256], strides = [1, 1]} : vector<8x1280xf32> to vector<8x256xf32>
    %22 = vector.extract_strided_slice %18 {offsets = [0, 512], sizes = [8, 256], strides = [1, 1]} : vector<8x1280xf32> to vector<8x256xf32>
    %23 = vector.extract_strided_slice %18 {offsets = [0, 768], sizes = [8, 256], strides = [1, 1]} : vector<8x1280xf32> to vector<8x256xf32>
    %24 = vector.extract_strided_slice %18 {offsets = [0, 1024], sizes = [8, 256], strides = [1, 1]} : vector<8x1280xf32> to vector<8x256xf32>
    %25 = tpu.concatenate %20, %21, %22, %23, %24 in 0 : vector<8x256xf32>, vector<8x256xf32>, vector<8x256xf32>, vector<8x256xf32>, vector<8x256xf32> -> vector<40x256xf32>
    %cst_12 = arith.constant dense<0.000000e+00> : vector<40x128xf32>
    %26 = tpu.matmul %25, %1, %cst_12 {dimension_numbers = #tpu.dot_dimension_numbers<[1], [0], [0], [1], [0, 0, 1, 1], [], []>} : vector<40x256xf32>, vector<256x128xf32>, vector<40x128xf32> -> vector<40x128xf32>
    %27 = vector.extract_strided_slice %26 {offsets = [0, 0], sizes = [8, 128], strides = [1, 1]} : vector<40x128xf32> to vector<8x128xf32>
    %28 = vector.extract_strided_slice %26 {offsets = [8, 0], sizes = [8, 128], strides = [1, 1]} : vector<40x128xf32> to vector<8x128xf32>
    %29 = vector.extract_strided_slice %26 {offsets = [16, 0], sizes = [8, 128], strides = [1, 1]} : vector<40x128xf32> to vector<8x128xf32>
    %30 = vector.extract_strided_slice %26 {offsets = [24, 0], sizes = [8, 128], strides = [1, 1]} : vector<40x128xf32> to vector<8x128xf32>
    %31 = vector.extract_strided_slice %26 {offsets = [32, 0], sizes = [8, 128], strides = [1, 1]} : vector<40x128xf32> to vector<8x128xf32>
    %32 = arith.mulf %27, %27 : vector<8x128xf32>
    %33 = arith.mulf %28, %28 : vector<8x128xf32>
    %34 = arith.mulf %27, %28 : vector<8x128xf32>
    %35 = arith.subf %29, %32 : vector<8x128xf32>
    %36 = arith.subf %30, %33 : vector<8x128xf32>
    %37 = arith.subf %31, %34 : vector<8x128xf32>
    %cst_13 = arith.constant 2.000000e+00 : f32
    %38 = vector.broadcast %cst_13 : f32 to vector<8x128xf32>
    %39 = arith.mulf %38, %34 : vector<8x128xf32>
    %cst_14 = arith.constant 6.502500e+00 : f32
    %40 = vector.broadcast %cst_14 : f32 to vector<8x128xf32>
    %41 = arith.addf %39, %40 : vector<8x128xf32>
    %cst_15 = arith.constant 2.000000e+00 : f32
    %42 = vector.broadcast %cst_15 : f32 to vector<8x128xf32>
    %43 = arith.mulf %42, %37 : vector<8x128xf32>
    %cst_16 = arith.constant 5.852250e+01 : f32
    %44 = vector.broadcast %cst_16 : f32 to vector<8x128xf32>
    %45 = arith.addf %43, %44 : vector<8x128xf32>
    %cst_17 = arith.constant 0.000000e+00 : f32
    %46 = vector.broadcast %cst_17 : f32 to vector<8x128xf32>
    %47 = arith.maximumf %45, %46 : vector<8x128xf32>
    %48 = arith.mulf %41, %47 : vector<8x128xf32>
    %49 = arith.addf %32, %33 : vector<8x128xf32>
    %cst_18 = arith.constant 6.502500e+00 : f32
    %50 = vector.broadcast %cst_18 : f32 to vector<8x128xf32>
    %51 = arith.addf %49, %50 : vector<8x128xf32>
    %52 = arith.addf %35, %36 : vector<8x128xf32>
    %cst_19 = arith.constant 5.852250e+01 : f32
    %53 = vector.broadcast %cst_19 : f32 to vector<8x128xf32>
    %54 = arith.addf %52, %53 : vector<8x128xf32>
    %55 = arith.mulf %51, %54 : vector<8x128xf32>
    %56 = arith.divf %48, %55 : vector<8x128xf32>
    %c6_i32 = arith.constant 6 : i32
    %57 = vector.broadcast %c6_i32 : i32 to vector<8x128xi32>
    %58 = arith.cmpi slt, %2, %57 : vector<8x128xi32>
    %c6_i32_20 = arith.constant 6 : i32
    %59 = vector.broadcast %c6_i32_20 : i32 to vector<8x128xi32>
    %60 = arith.cmpi slt, %3, %59 : vector<8x128xi32>
    %61 = arith.andi %58, %60 : vector<8x128xi1>
    %cst_21 = arith.constant 0.000000e+00 : f32
    %62 = vector.broadcast %cst_21 : f32 to vector<8x128xf32>
    %63 = arith.select %61, %56, %62 : vector<8x128xi1>, vector<8x128xf32>
    %cst_22 = arith.constant dense<0.000000e+00> : vector<8xf32>
    %64 = vector.multi_reduction <add>, %63, %cst_22 [1] : vector<8x128xf32> to vector<8xf32>
    %65 = vector.shape_cast %64 : vector<8xf32> to vector<8x1xf32>
    %cst_23 = arith.constant dense<0.000000e+00> : vector<1xf32>
    %66 = vector.multi_reduction <add>, %65, %cst_23 [0] : vector<8x1xf32> to vector<1xf32>
    %67 = vector.shape_cast %66 : vector<1xf32> to vector<1x1xf32>
    %68 = arith.addf %19, %67 : vector<1x1xf32>
    %cst_24 = arith.constant 0.027777778 : f32
    %69 = vector.broadcast %cst_24 : f32 to vector<1x1xf32>
    %70 = arith.mulf %68, %69 : vector<1x1xf32>
    %71 = vector.shape_cast %70 : vector<1x1xf32> to vector<1x1xf32>
    %72 = vector.broadcast %71 : vector<1x1xf32> to vector<8x128xf32>
    %c0_25 = arith.constant 0 : index
    %c0_26 = arith.constant 0 : index
    %c0_27 = arith.constant 0 : index
    %73 = vector.load %arg5[%c0_25, %c0_26, %c0_27] : memref<1x8x128xf32, #tpu.memory_space<vmem>>, vector<1x8x128xf32>
    %74 = vector.shape_cast %73 : vector<1x8x128xf32> to vector<8x128xf32>
    %75 = vector.shape_cast %72 : vector<8x128xf32> to vector<1x8x128xf32>
    tpu.vector_store %arg5[%c0_25, %c0_26, %c0_27], %75 {strides = array<i32>} : memref<1x8x128xf32, #tpu.memory_space<vmem>>, vector<1x8x128xf32>,
    return
  }
  func.func @transform_0(%arg0: i32) -> (i32, i32, i32) {
    %c0_i32 = arith.constant 0 : i32
    %c0_i32_0 = arith.constant 0 : i32
    %c0_i32_1 = arith.constant 0 : i32
    return %arg0, %c0_i32, %c0_i32_0 : i32, i32, i32
  }
  func.func @transform_1(%arg0: i32) -> (i32, i32, i32) {
    %c0_i32 = arith.constant 0 : i32
    %c0_i32_0 = arith.constant 0 : i32
    %c0_i32_1 = arith.constant 0 : i32
    return %arg0, %c0_i32, %c0_i32_0 : i32, i32, i32
  }
  func.func @transform_2(%arg0: i32) -> (i32, i32) {
    %c0_i32 = arith.constant 0 : i32
    %c0_i32_0 = arith.constant 0 : i32
    %c0_i32_1 = arith.constant 0 : i32
    return %c0_i32, %c0_i32_0 : i32, i32
  }
  func.func @transform_3(%arg0: i32) -> (i32, i32) {
    %c0_i32 = arith.constant 0 : i32
    %c0_i32_0 = arith.constant 0 : i32
    %c0_i32_1 = arith.constant 0 : i32
    return %c0_i32, %c0_i32_0 : i32, i32
  }
  func.func @transform_4(%arg0: i32) -> (i32, i32, i32) {
    %c0_i32 = arith.constant 0 : i32
    %c0_i32_0 = arith.constant 0 : i32
    %c0_i32_1 = arith.constant 0 : i32
    return %arg0, %c0_i32, %c0_i32_0 : i32, i32, i32
  }
}

</mosaic_0001>

<llo_original>
// kernel: tpu_custom_call.1
$region0: #{tpu_custom_call.1}
  #allocation0 [shape = 'u32[]', space=smem, size = 0x4, offset = 0x4, fixed_abs, tag = 'smem constant byte address 0x4 - core index']
  #allocation1 [shape = 'u32[144,128]{1,0:T(1,128)}', space=vmem, size = 0x12000, scoped, tag = 'internal scratch']
  %s0 = inlined_call_operand.hbm [shape: f32[2,16,256], index: 0, kind: input, shape index: {}]
  %s1 = inlined_call_operand.hbm [shape: f32[2,16,256], index: 1, kind: input, shape index: {}]
  %s2 = inlined_call_operand.hbm [shape: f32[8,16], index: 2, kind: input, shape index: {}]
  %s3 = inlined_call_operand.hbm [shape: f32[256,128], index: 3, kind: input, shape index: {}]
  %s4 = inlined_call_operand.hbm [shape: f32[2,8,128], index: 4, kind: output, shape index: {}]
  %s5 = sld [smem:[#allocation0]]
  $region65: #{tpu_custom_call.1} parent=0
    _
  %s7 = ssub.s32 1, %s5
  %s8 = scalar_select 0, %s7, %s5
  $region1: #{tpu_custom_call.1} parent=0
    #allocation2 [shape = 'u8[32768]{0}', space=vmem, size = 0x8000, scoped, tag = 'input window, operand 0']
    #allocation3 [shape = 's32[2]{0}', space=sflag, size = 0x8, scoped, tag = 'scoped memory for tpu_custom_call.1']
    #allocation4 [shape = 's32[2]{0}', space=sflag, size = 0x8, scoped, tag = 'scoped memory for tpu_custom_call.1']
    #allocation5 [shape = 'u8[32768]{0}', space=vmem, size = 0x8000, scoped, tag = 'input window, operand 1']
    #allocation6 [shape = 's32[2]{0}', space=sflag, size = 0x8, scoped, tag = 'scoped memory for tpu_custom_call.1']
    #allocation7 [shape = 'u8[4096]{0}', space=vmem, size = 0x1000, scoped, tag = 'input window, operand 2, single buffered']
    #allocation8 [shape = 'u8[131072]{0}', space=vmem, size = 0x20000, scoped, tag = 'input window, operand 3, single buffered']
    #allocation9 [shape = 's32[1]{0}', space=sflag, size = 0x4, scoped, tag = 'scoped memory for tpu_custom_call.1']
    #allocation10 [shape = 'u8[8192]{0}', space=vmem, size = 0x2000, scoped, tag = 'output window, operand 0']
    %9 = vsyncpa [#allocation3], 0
    %s10 = scalar_lea.sflag [#allocation3], 1
    %11 = vsyncpa %s10, 0
    %12 = vsyncpa [#allocation6], 0
    %s13 = scalar_lea.sflag [#allocation6], 1
    %14 = vsyncpa %s13, 0
    %15 = vsyncpa [#allocation9], 0
    %16 = vsyncpa [#allocation4], 0
    %s17 = scalar_lea.sflag [#allocation4], 1
    %18 = vsyncpa %s17, 0
    loop: start=0, step=1, limit=4
    $region2: #{tpu_custom_call.1} parent=1 // loop_pre_header
      _
    $region3: #{tpu_custom_call.1} parent=1 // loop_header
      %s20 = sphi 0, %s24
      %p21 = scmp.ge.s32.totalorder %s20, 4
      %s30 = sphi 0, %s32
      %s33 = sphi 0, %s30
      %s34 = sphi 0, %s33
      %s50 = sphi 0, %s34
      %s56 = sphi 0, %s58
      %s59 = sphi 0, %s56
      %s60 = sphi 0, %s59
      %s76 = sphi 0, %s60
      %s80 = sphi 0, %s80
      %s82 = sphi 0, %s80
      %s83 = sphi 0, %s82
      %s97 = sphi 0, %s83
      %s101 = sphi 0, %s101
      %s103 = sphi 0, %s101
      %s104 = sphi 0, %s103
      %s118 = sphi 0, %s104
      %s124 = sphi 0, %s126
      %s127 = sphi 0, %s124
      %s128 = sphi 0, %s127
      %s144 = sphi 0, %s128
    $region4: #{tpu_custom_call.1} parent=1 // loop_header_branch
      %23 = sbr.rel (%p21) target = $region8
    $region5: #{tpu_custom_call.1} parent=1 // loop_body
      %s25 = ssub.s32 %s20, 1
      %s26 = ssub.s32 %s20, 2
      %s27 = sadd.s32 %s20, 1
      %s28 = ssub.s32 %s20, %s27
      %p29 = scmp.eq.s32.totalorder %s28, 0
      %s31 = sadd.s32 %s30, 1
      %s32 = scalar_select %p29, %s30, %s31
      %p35 = pneg %p29
      %p36 = scmp.eq.s32.totalorder %s20, 1
      %p37 = por %p35, %p36
      %p38 = scmp.ne.s32.totalorder %s30, %s33
      %p39 = scmp.eq.s32.totalorder %s20, 0
      %p40 = por %p38, %p39
      %p41 = scmp.ne.s32.totalorder %s30, %s33
      %p42 = scmp.eq.s32.totalorder %s25, 1
      %p43 = por %p41, %p42
      %p44 = scmp.ne.s32.totalorder %s33, %s34
      %p45 = scmp.eq.s32.totalorder %s25, 0
      %p46 = por %p44, %p45
      %p47 = scmp.ne.s32.totalorder %s33, %s34
      %p48 = scmp.eq.s32.totalorder %s26, 1
      %p49 = por %p47, %p48
      %p51 = scmp.ne.s32.totalorder %s34, %s50
      %p52 = scmp.eq.s32.totalorder %s26, 0
      %p53 = por %p51, %p52
      %s54 = ssub.s32 %s20, %s27
      %p55 = scmp.eq.s32.totalorder %s54, 0
      %s57 = sadd.s32 %s56, 1
      %s58 = scalar_select %p55, %s56, %s57
      %p61 = pneg %p55
      %p62 = scmp.eq.s32.totalorder %s20, 1
      %p63 = por %p61, %p62
      %p64 = scmp.ne.s32.totalorder %s56, %s59
      %p65 = scmp.eq.s32.totalorder %s20, 0
      %p66 = por %p64, %p65
      %p67 = scmp.ne.s32.totalorder %s56, %s59
      %p68 = scmp.eq.s32.totalorder %s25, 1
      %p69 = por %p67, %p68
      %p70 = scmp.ne.s32.totalorder %s59, %s60
      %p71 = scmp.eq.s32.totalorder %s25, 0
      %p72 = por %p70, %p71
      %p73 = scmp.ne.s32.totalorder %s59, %s60
      %p74 = scmp.eq.s32.totalorder %s26, 1
      %p75 = por %p73, %p74
      %p77 = scmp.ne.s32.totalorder %s60, %s76
      %p78 = scmp.eq.s32.totalorder %s26, 0
      %p79 = por %p77, %p78
      %s81 = sadd.s32 %s80, 1
      %p84 = scmp.eq.s32.totalorder %s20, 1
      %p85 = scmp.ne.s32.totalorder %s80, %s82
      %p86 = scmp.eq.s32.totalorder %s20, 0
      %p87 = por %p85, %p86
      %p88 = scmp.ne.s32.totalorder %s80, %s82
      %p89 = scmp.eq.s32.totalorder %s25, 1
      %p90 = por %p88, %p89
      %p91 = scmp.ne.s32.totalorder %s82, %s83
      %p92 = scmp.eq.s32.totalorder %s25, 0
      %p93 = por %p91, %p92
      %p94 = scmp.ne.s32.totalorder %s82, %s83
      %p95 = scmp.eq.s32.totalorder %s26, 1
      %p96 = por %p94, %p95
      %p98 = scmp.ne.s32.totalorder %s83, %s97
      %p99 = scmp.eq.s32.totalorder %s26, 0
      %p100 = por %p98, %p99
      %s102 = sadd.s32 %s101, 1
      %p105 = scmp.eq.s32.totalorder %s20, 1
      %p106 = scmp.ne.s32.totalorder %s101, %s103
      %p107 = scmp.eq.s32.totalorder %s20, 0
      %p108 = por %p106, %p107
      %p109 = scmp.ne.s32.totalorder %s101, %s103
      %p110 = scmp.eq.s32.totalorder %s25, 1
      %p111 = por %p109, %p110
      %p112 = scmp.ne.s32.totalorder %s103, %s104
      %p113 = scmp.eq.s32.totalorder %s25, 0
      %p114 = por %p112, %p113
      %p115 = scmp.ne.s32.totalorder %s103, %s104
      %p116 = scmp.eq.s32.totalorder %s26, 1
      %p117 = por %p115, %p116
      %p119 = scmp.ne.s32.totalorder %s104, %s118
      %p120 = scmp.eq.s32.totalorder %s26, 0
      %p121 = por %p119, %p120
      %s122 = ssub.s32 %s20, %s27
      %p123 = scmp.eq.s32.totalorder %s122, 0
      %s125 = sadd.s32 %s124, 1
      %s126 = scalar_select %p123, %s124, %s125
      %p129 = pneg %p123
      %p130 = scmp.eq.s32.totalorder %s20, 1
      %p131 = por %p129, %p130
      %p132 = scmp.ne.s32.totalorder %s124, %s127
      %p133 = scmp.eq.s32.totalorder %s20, 0
      %p134 = por %p132, %p133
      %p135 = scmp.ne.s32.totalorder %s124, %s127
      %p136 = scmp.eq.s32.totalorder %s25, 1
      %p137 = por %p135, %p136
      %p138 = scmp.ne.s32.totalorder %s127, %s128
      %p139 = scmp.eq.s32.totalorder %s25, 0
      %p140 = por %p138, %p139
      %p141 = scmp.ne.s32.totalorder %s127, %s128
      %p142 = scmp.eq.s32.totalorder %s26, 1
      %p143 = por %p141, %p142
      %p145 = scmp.ne.s32.totalorder %s128, %s144
      %p146 = scmp.eq.s32.totalorder %s26, 0
      %p147 = por %p145, %p146
      %p148 = scmp.le.s32.totalorder 1, %s20
      %p149 = scmp.lt.s32.totalorder %s20, 3
      %p150 = pnand %p148, %p149
      %p151 = pneg %p150
      // Predicated region
      $region9: #{tpu_custom_call.1} parent=5 // pred_check
        _
      $region10: #{tpu_custom_call.1} parent=5 // pred_check_branch
        %153 = sbr.rel (%p150) target = $region12
      $region11: #{tpu_custom_call.1} parent=5 // pred_region
        %s154 = ssub.s32 %s20, 1
        // Predicated region
        $region13: #{tpu_custom_call.1} parent=11 // pred_check
          %p155 = pneg %p93
        $region14: #{tpu_custom_call.1} parent=11 // pred_check_branch
          %157 = sbr.rel (%p155) target = $region16
        $region15: #{tpu_custom_call.1} parent=11 // pred_region
          %s159 = ssub.s32 128, 128
          %160 = vsyncadd [#allocation6], %s159
          %s162 = sshll.u32 [#allocation7], 4
          %s163 = int_to_ptr.vmem [resolvable:$true] %s162
          %165 = dma.hbm_to_vmem [thread:$0]  %s2, 128, %s163, [#allocation6]
        $region16: #{tpu_custom_call.1} parent=11 // pred_fallthru
          _
        // Predicated region
        $region17: #{tpu_custom_call.1} parent=11 // pred_check
          %p166 = pneg %p114
        $region18: #{tpu_custom_call.1} parent=11 // pred_check_branch
          %168 = sbr.rel (%p166) target = $region20
        $region19: #{tpu_custom_call.1} parent=11 // pred_region
          %s170 = ssub.s32 4096, 4096
          %171 = vsyncadd [#allocation9], %s170
          %s172 = sshll.u32 [#allocation8], 4
          %s173 = int_to_ptr.vmem [resolvable:$true] %s172
          %178 = dma.hbm_to_vmem [thread:$0]  %s3, 4096, %s173, [#allocation9], 128, 128, 8
        $region20: #{tpu_custom_call.1} parent=11 // pred_fallthru
          _
      $region12: #{tpu_custom_call.1} parent=5 // pred_fallthru
        _
      %p179 = scmp.lt.s32.totalorder %s20, 2
      // Predicated region
      $region21: #{tpu_custom_call.1} parent=5 // pred_check
        %p180 = pneg %p179
      $region22: #{tpu_custom_call.1} parent=5 // pred_check_branch
        %182 = sbr.rel (%p180) target = $region24
      $region23: #{tpu_custom_call.1} parent=5 // pred_region
        // Predicated region
        $region25: #{tpu_custom_call.1} parent=23 // pred_check
          %p183 = pneg %p40
        $region26: #{tpu_custom_call.1} parent=23 // pred_check_branch
          %185 = sbr.rel (%p183) target = $region28
        $region27: #{tpu_custom_call.1} parent=23 // pred_region
          %s186 = sand.u32 %s30, 1
          %s187 = scalar_lea.sflag [#allocation3], %s186
          %s188 = sand.u32 %s30, 1
          %s189 = smul.addr %s188, 32
          %s190 = scalar_lea.vmem [#allocation2], %s189
          %s192 = ssub.s32 512, 512
          %193 = vsyncadd %s187, %s192
          %s194 = smul.addr %s20, 4
          %s195 = smul.addr %s194, 128
          %s196 = scalar_lea.hbm %s0, %s195
          %s197 = sshll.u32 %s190, 4
          %s198 = int_to_ptr.vmem [resolvable:$true] %s197
          %203 = dma.hbm_to_vmem [thread:$0]  %s196, 512, %s198, %s187, 256, 256, 16
        $region28: #{tpu_custom_call.1} parent=23 // pred_fallthru
          _
        // Predicated region
        $region29: #{tpu_custom_call.1} parent=23 // pred_check
          %p204 = pneg %p66
        $region30: #{tpu_custom_call.1} parent=23 // pred_check_branch
          %206 = sbr.rel (%p204) target = $region32
        $region31: #{tpu_custom_call.1} parent=23 // pred_region
          %s207 = sand.u32 %s20, 1
          %s208 = scalar_lea.sflag [#allocation6], %s207
          %s209 = sand.u32 %s56, 1
          %s210 = smul.addr %s209, 32
          %s211 = scalar_lea.vmem [#allocation5], %s210
          %s213 = ssub.s32 512, 512
          %214 = vsyncadd %s208, %s213
          %s215 = smul.addr %s20, 4
          %s216 = smul.addr %s215, 128
          %s217 = scalar_lea.hbm %s1, %s216
          %s218 = sshll.u32 %s211, 4
          %s219 = int_to_ptr.vmem [resolvable:$true] %s218
          %224 = dma.hbm_to_vmem [thread:$0]  %s217, 512, %s219, %s208, 256, 256, 16
        $region32: #{tpu_custom_call.1} parent=23 // pred_fallthru
          _
      $region24: #{tpu_custom_call.1} parent=5 // pred_fallthru
        _
      %p225 = scmp.le.s32.totalorder 1, %s20
      %p226 = scmp.lt.s32.totalorder %s20, 3
      %p227 = pnand %p225, %p226
      %p228 = pneg %p227
      // Predicated region
      $region33: #{tpu_custom_call.1} parent=5 // pred_check
        _
      $region34: #{tpu_custom_call.1} parent=5 // pred_check_branch
        %230 = sbr.rel (%p227) target = $region36
      $region35: #{tpu_custom_call.1} parent=5 // pred_region
        %s231 = ssub.s32 %s20, 1
        %s232 = sand.u32 %s33, 1
        %s233 = scalar_lea.sflag [#allocation3], %s232
        %s234 = sand.u32 %s33, 1
        %s235 = smul.addr %s234, 32
        %s236 = scalar_lea.vmem [#allocation2], %s235
        // Predicated region
        $region37: #{tpu_custom_call.1} parent=35 // pred_check
          %p237 = pneg %p46
        $region38: #{tpu_custom_call.1} parent=35 // pred_check_branch
          %239 = sbr.rel (%p237) target = $region40
        $region39: #{tpu_custom_call.1} parent=35 // pred_region
          %240 = dma.done %s233, 512
        $region40: #{tpu_custom_call.1} parent=35 // pred_fallthru
          _
        %s241 = sand.u32 %s25, 1
        %s242 = scalar_lea.sflag [#allocation6], %s241
        %s243 = sand.u32 %s59, 1
        %s244 = smul.addr %s243, 32
        %s245 = scalar_lea.vmem [#allocation5], %s244
        // Predicated region
        $region41: #{tpu_custom_call.1} parent=35 // pred_check
          %p246 = pneg %p72
        $region42: #{tpu_custom_call.1} parent=35 // pred_check_branch
          %248 = sbr.rel (%p246) target = $region44
        $region43: #{tpu_custom_call.1} parent=35 // pred_region
          %249 = dma.done %s242, 512
        $region44: #{tpu_custom_call.1} parent=35 // pred_fallthru
          _
        // Predicated region
        $region45: #{tpu_custom_call.1} parent=35 // pred_check
          %p250 = pneg %p93
        $region46: #{tpu_custom_call.1} parent=35 // pred_check_branch
          %252 = sbr.rel (%p250) target = $region48
        $region47: #{tpu_custom_call.1} parent=35 // pred_region
          %253 = dma.done [#allocation6], 128
        $region48: #{tpu_custom_call.1} parent=35 // pred_fallthru
          _
        // Predicated region
        $region49: #{tpu_custom_call.1} parent=35 // pred_check
          %p254 = pneg %p114
        $region50: #{tpu_custom_call.1} parent=35 // pred_check_branch
          %256 = sbr.rel (%p254) target = $region52
        $region51: #{tpu_custom_call.1} parent=35 // pred_region
          %257 = dma.done [#allocation9], 4096
        $region52: #{tpu_custom_call.1} parent=35 // pred_fallthru
          _
        %s258 = sand.u32 %s33, 1
        %s259 = scalar_lea.sflag [#allocation3], %s258
        %s260 = sand.u32 %s33, 1
        %s261 = smul.addr %s260, 32
        %s262 = scalar_lea.vmem [#allocation2], %s261
        %p263 = pneg %p46
        %p264 = pneg %p43
        %s265 = sand.u32 %s25, 1
        %s266 = scalar_lea.sflag [#allocation6], %s265
        %s267 = sand.u32 %s59, 1
        %s268 = smul.addr %s267, 32
        %s269 = scalar_lea.vmem [#allocation5], %s268
        %p270 = pneg %p72
        %p271 = pneg %p69
        %p272 = pneg %p93
        %p273 = pneg %p90
        %p274 = pneg %p114
        %p275 = pneg %p111
        %p276 = pneg %p140
        %p277 = pneg %p137
        %s278 = sand.u32 %s127, 1
        %s279 = scalar_lea.sflag [#allocation4], %s278
        %s280 = sand.u32 %s127, 1
        %s281 = smul.addr %s280, 8
        %s282 = scalar_lea.vmem [#allocation10], %s281
        %v283 = vld [vmem:[#allocation7] sm:$0xff]
        %v284 = vld [vmem:[#allocation8] sm:$0xff]
        %v285 = vld [vmem:[#allocation8 + $0x8] sm:$0xff]
        %v286 = vld [vmem:[#allocation8 + $0x10] sm:$0xff]
        %v287 = vld [vmem:[#allocation8 + $0x18] sm:$0xff]
        %v288 = vld [vmem:[#allocation8 + $0x20] sm:$0xff]
        %v289 = vld [vmem:[#allocation8 + $0x28] sm:$0xff]
        %v290 = vld [vmem:[#allocation8 + $0x30] sm:$0xff]
        %v291 = vld [vmem:[#allocation8 + $0x38] sm:$0xff]
        %v292 = vld [vmem:[#allocation8 + $0x40] sm:$0xff]
        %v293 = vld [vmem:[#allocation8 + $0x48] sm:$0xff]
        %v294 = vld [vmem:[#allocation8 + $0x50] sm:$0xff]
        %v295 = vld [vmem:[#allocation8 + $0x58] sm:$0xff]
        %v296 = vld [vmem:[#allocation8 + $0x60] sm:$0xff]
        %v297 = vld [vmem:[#allocation8 + $0x68] sm:$0xff]
        %v298 = vld [vmem:[#allocation8 + $0x70] sm:$0xff]
        %v299 = vld [vmem:[#allocation8 + $0x78] sm:$0xff]
        %v300 = vld [vmem:[#allocation8 + $0x80] sm:$0xff]
        %v301 = vld [vmem:[#allocation8 + $0x88] sm:$0xff]
        %v302 = vld [vmem:[#allocation8 + $0x90] sm:$0xff]
        %v303 = vld [vmem:[#allocation8 + $0x98] sm:$0xff]
        %v304 = vld [vmem:[#allocation8 + $0xa0] sm:$0xff]
        %v305 = vld [vmem:[#allocation8 + $0xa8] sm:$0xff]
        %v306 = vld [vmem:[#allocation8 + $0xb0] sm:$0xff]
        %v307 = vld [vmem:[#allocation8 + $0xb8] sm:$0xff]
        %v308 = vld [vmem:[#allocation8 + $0xc0] sm:$0xff]
        %v309 = vld [vmem:[#allocation8 + $0xc8] sm:$0xff]
        %v310 = vld [vmem:[#allocation8 + $0xd0] sm:$0xff]
        %v311 = vld [vmem:[#allocation8 + $0xd8] sm:$0xff]
        %v312 = vld [vmem:[#allocation8 + $0xe0] sm:$0xff]
        %v313 = vld [vmem:[#allocation8 + $0xe8] sm:$0xff]
        %v314 = vld [vmem:[#allocation8 + $0xf0] sm:$0xff]
        %v315 = vld [vmem:[#allocation8 + $0xf8] sm:$0xff]
        %v316 = vlaneseq
        %v317 = vshrl.u32 %v316, 7
        %v318 = vlaneseq
        %v319 = vand.u32 %v318, 127
        %v320 = vld [vmem:[%s236] sm:$0xff]
        %v321 = vld [vmem:[%s236 + $0x8] sm:$0xff]
        %v322 = vld [vmem:[%s236 + $0x10] sm:$0xff]
        %v323 = vld [vmem:[%s236 + $0x18] sm:$0xff]
        %v324 = vmul.f32 %v320, 255.0
        %v325 = vmul.f32 %v321, 255.0
        %v326 = vmul.f32 %v322, 255.0
        %v327 = vmul.f32 %v323, 255.0
        %v328 = vround.ne.pseudo %v324
        %v329 = vround.ne.pseudo %v325
        %v330 = vround.ne.pseudo %v326
        %v331 = vround.ne.pseudo %v327
        %v332 = vld [vmem:[%s245] sm:$0xff]
        %v333 = vld [vmem:[%s245 + $0x8] sm:$0xff]
        %v334 = vld [vmem:[%s245 + $0x10] sm:$0xff]
        %v335 = vld [vmem:[%s245 + $0x18] sm:$0xff]
        %v336 = vmul.f32 %v332, 255.0
        %v337 = vmul.f32 %v333, 255.0
        %v338 = vmul.f32 %v334, 255.0
        %v339 = vmul.f32 %v335, 255.0
        %v340 = vround.ne.pseudo %v336
        %v341 = vround.ne.pseudo %v337
        %v342 = vround.ne.pseudo %v338
        %v343 = vround.ne.pseudo %v339
        %v344 = vmul.f32 %v328, %v328
        %v345 = vmul.f32 %v329, %v329
        %v346 = vmul.f32 %v330, %v330
        %v347 = vmul.f32 %v331, %v331
        %v348 = vmul.f32 %v340, %v340
        %v349 = vmul.f32 %v341, %v341
        %v350 = vmul.f32 %v342, %v342
        %v351 = vmul.f32 %v343, %v343
        %v352 = vmul.f32 %v328, %v340
        %v353 = vmul.f32 %v329, %v341
        %v354 = vmul.f32 %v330, %v342
        %v355 = vmul.f32 %v331, %v343
        %vm356 = vcmask 130048
        %v358 = vsel %vm356, %v283, 0
        %360 = vmatprep.subr.mxu0 %v329
        %361 = vmatpush1.msra.mxu0 %v328
        %362 = vmatprep.subr.mxu0 %v331
        %363 = vmatpush1.msra.mxu0 %v330
        %364 = vmatprep.subr.mxu0 0.0
        %365 = vmatpush1.msra.mxu0 0.0
        %366 = vmatprep.subr.mxu0 0.0
        %367 = vmatpush1.msra.mxu0 0.0
        %368 = vmatprep.subr.mxu0 0.0
        %369 = vmatpush1.msra.mxu0 0.0
        %370 = vmatprep.subr.mxu0 0.0
        %371 = vmatpush1.msra.mxu0 0.0
        %372 = vmatprep.subr.mxu0 0.0
        %373 = vmatpush1.msra.mxu0 0.0
        %374 = vmatprep.subr.mxu0 0.0
        %375 = vmatpush1.msra.mxu0 0.0
        %376 = vmatprep.subr.mxu0 0.0
        %377 = vmatpush1.msra.mxu0 0.0
        %378 = vmatprep.subr.mxu0 0.0
        %379 = vmatpush1.msra.mxu0 0.0
        %380 = vmatprep.subr.mxu0 0.0
        %381 = vmatpush1.msra.mxu0 0.0
        %382 = vmatprep.subr.mxu0 0.0
        %383 = vmatpush1.msra.mxu0 0.0
        %384 = vmatprep.subr.mxu0 0.0
        %385 = vmatpush1.msra.mxu0 0.0
        %386 = vmatprep.subr.mxu0 0.0
        %387 = vmatpush1.msra.mxu0 0.0
        %388 = vmatprep.subr.mxu0 0.0
        %389 = vmatpush1.msra.mxu0 0.0
        %390 = vmatprep.subr.mxu0 0.0
        %391 = vmatpush1.msra.mxu0 0.0
        %392 = vmatprep.subr.mxu0 0.0
        %393 = vmatpush1.msra.mxu0 0.0
        %394 = vmatprep.subr.mxu0 0.0
        %395 = vmatpush1.msra.mxu0 0.0
        %396 = vmatprep.subr.mxu0 0.0
        %397 = vmatpush1.msra.mxu0 0.0
        %398 = vmatprep.subr.mxu0 0.0
        %399 = vmatpush1.msra.mxu0 0.0
        %400 = vmatprep.subr.mxu0 0.0
        %401 = vmatpush1.msra.mxu0 0.0
        %402 = vmatprep.subr.mxu0 0.0
        %403 = vmatpush1.msra.mxu0 0.0
        %404 = vmatprep.subr.mxu0 0.0
        %405 = vmatpush1.msra.mxu0 0.0
        %406 = vmatprep.subr.mxu0 0.0
        %407 = vmatpush1.msra.mxu0 0.0
        %408 = vmatprep.subr.mxu0 0.0
        %409 = vmatpush1.msra.mxu0 0.0
        %410 = vmatprep.subr.mxu0 0.0
        %411 = vmatpush1.msra.mxu0 0.0
        %412 = vmatprep.subr.mxu0 0.0
        %413 = vmatpush1.msra.mxu0 0.0
        %414 = vmatprep.subr.mxu0 0.0
        %415 = vmatpush1.msra.mxu0 0.0
        %416 = vmatprep.subr.mxu0 0.0
        %417 = vmatpush1.msra.mxu0 0.0
        %418 = vmatprep.subr.mxu0 0.0
        %419 = vmatpush1.msra.mxu0 0.0
        %420 = vmatprep.subr.mxu0 0.0
        %421 = vmatpush1.msra.mxu0 0.0
        %422 = vmatprep.subr.mxu0 0.0
        %423 = vmatpush1.msra.mxu0 0.0
        %424 = vmatprep.mubr.f32.mxu0 0.0
        %425 = vmatmul.mubr.f32.gmra.mrb[0].mxu0 %v358
        %v426 = vpop.f32.mrb[0].mxu0
        %v427 = vadd.f32 0.0, %v426
        %v428 = vpop.f32.mrb[0].mxu0
        %v429 = vadd.f32 0.0, %v428
        %430 = vdwg.mxu0
        %431 = vmatprep.subr.mxu0 %v341
        %432 = vmatpush1.msra.mxu0 %v340
        %433 = vmatprep.subr.mxu0 %v343
        %434 = vmatpush1.msra.mxu0 %v342
        %435 = vmatprep.subr.mxu0 0.0
        %436 = vmatpush1.msra.mxu0 0.0
        %437 = vmatprep.subr.mxu0 0.0
        %438 = vmatpush1.msra.mxu0 0.0
        %439 = vmatprep.subr.mxu0 0.0
        %440 = vmatpush1.msra.mxu0 0.0
        %441 = vmatprep.subr.mxu0 0.0
        %442 = vmatpush1.msra.mxu0 0.0
        %443 = vmatprep.subr.mxu0 0.0
        %444 = vmatpush1.msra.mxu0 0.0
        %445 = vmatprep.subr.mxu0 0.0
        %446 = vmatpush1.msra.mxu0 0.0
        %447 = vmatprep.subr.mxu0 0.0
        %448 = vmatpush1.msra.mxu0 0.0
        %449 = vmatprep.subr.mxu0 0.0
        %450 = vmatpush1.msra.mxu0 0.0
        %451 = vmatprep.subr.mxu0 0.0
        %452 = vmatpush1.msra.mxu0 0.0
        %453 = vmatprep.subr.mxu0 0.0
        %454 = vmatpush1.msra.mxu0 0.0
        %455 = vmatprep.subr.mxu0 0.0
        %456 = vmatpush1.msra.mxu0 0.0
        %457 = vmatprep.subr.mxu0 0.0
        %458 = vmatpush1.msra.mxu0 0.0
        %459 = vmatprep.subr.mxu0 0.0
        %460 = vmatpush1.msra.mxu0 0.0
        %461 = vmatprep.subr.mxu0 0.0
        %462 = vmatpush1.msra.mxu0 0.0
        %463 = vmatprep.subr.mxu0 0.0
        %464 = vmatpush1.msra.mxu0 0.0
        %465 = vmatprep.subr.mxu0 0.0
        %466 = vmatpush1.msra.mxu0 0.0
        %467 = vmatprep.subr.mxu0 0.0
        %468 = vmatpush1.msra.mxu0 0.0
        %469 = vmatprep.subr.mxu0 0.0
        %470 = vmatpush1.msra.mxu0 0.0
        %471 = vmatprep.subr.mxu0 0.0
        %472 = vmatpush1.msra.mxu0 0.0
        %473 = vmatprep.subr.mxu0 0.0
        %474 = vmatpush1.msra.mxu0 0.0
        %475 = vmatprep.subr.mxu0 0.0
        %476 = vmatpush1.msra.mxu0 0.0
        %477 = vmatprep.subr.mxu0 0.0
        %478 = vmatpush1.msra.mxu0 0.0
        %479 = vmatprep.subr.mxu0 0.0
        %480 = vmatpush1.msra.mxu0 0.0
        %481 = vmatprep.subr.mxu0 0.0
        %482 = vmatpush1.msra.mxu0 0.0
        %483 = vmatprep.subr.mxu0 0.0
        %484 = vmatpush1.msra.mxu0 0.0
        %485 = vmatprep.subr.mxu0 0.0
        %486 = vmatpush1.msra.mxu0 0.0
        %487 = vmatprep.subr.mxu0 0.0
        %488 = vmatpush1.msra.mxu0 0.0
        %489 = vmatprep.subr.mxu0 0.0
        %490 = vmatpush1.msra.mxu0 0.0
        %491 = vmatprep.subr.mxu0 0.0
        %492 = vmatpush1.msra.mxu0 0.0
        %493 = vmatprep.subr.mxu0 0.0
        %494 = vmatpush1.msra.mxu0 0.0
        %495 = vmatprep.mubr.f32.mxu0 0.0
        %496 = vmatmul.mubr.f32.gmra.mrb[0].mxu0 %v358
        %v497 = vpop.f32.mrb[0].mxu0
        %v498 = vadd.f32 0.0, %v497
        %v499 = vpop.f32.mrb[0].mxu0
        %v500 = vadd.f32 0.0, %v499
        %501 = vdwg.mxu0
        %502 = vmatprep.subr.mxu0 %v345
        %503 = vmatpush1.msra.mxu0 %v344
        %504 = vmatprep.subr.mxu0 %v347
        %505 = vmatpush1.msra.mxu0 %v346
        %506 = vmatprep.subr.mxu0 0.0
        %507 = vmatpush1.msra.mxu0 0.0
        %508 = vmatprep.subr.mxu0 0.0
        %509 = vmatpush1.msra.mxu0 0.0
        %510 = vmatprep.subr.mxu0 0.0
        %511 = vmatpush1.msra.mxu0 0.0
        %512 = vmatprep.subr.mxu0 0.0
        %513 = vmatpush1.msra.mxu0 0.0
        %514 = vmatprep.subr.mxu0 0.0
        %515 = vmatpush1.msra.mxu0 0.0
        %516 = vmatprep.subr.mxu0 0.0
        %517 = vmatpush1.msra.mxu0 0.0
        %518 = vmatprep.subr.mxu0 0.0
        %519 = vmatpush1.msra.mxu0 0.0
        %520 = vmatprep.subr.mxu0 0.0
        %521 = vmatpush1.msra.mxu0 0.0
        %522 = vmatprep.subr.mxu0 0.0
        %523 = vmatpush1.msra.mxu0 0.0
        %524 = vmatprep.subr.mxu0 0.0
        %525 = vmatpush1.msra.mxu0 0.0
        %526 = vmatprep.subr.mxu0 0.0
        %527 = vmatpush1.msra.mxu0 0.0
        %528 = vmatprep.subr.mxu0 0.0
        %529 = vmatpush1.msra.mxu0 0.0
        %530 = vmatprep.subr.mxu0 0.0
        %531 = vmatpush1.msra.mxu0 0.0
        %532 = vmatprep.subr.mxu0 0.0
        %533 = vmatpush1.msra.mxu0 0.0
        %534 = vmatprep.subr.mxu0 0.0
        %535 = vmatpush1.msra.mxu0 0.0
        %536 = vmatprep.subr.mxu0 0.0
        %537 = vmatpush1.msra.mxu0 0.0
        %538 = vmatprep.subr.mxu0 0.0
        %539 = vmatpush1.msra.mxu0 0.0
        %540 = vmatprep.subr.mxu0 0.0
        %541 = vmatpush1.msra.mxu0 0.0
        %542 = vmatprep.subr.mxu0 0.0
        %543 = vmatpush1.msra.mxu0 0.0
        %544 = vmatprep.subr.mxu0 0.0
        %545 = vmatpush1.msra.mxu0 0.0
        %546 = vmatprep.subr.mxu0 0.0
        %547 = vmatpush1.msra.mxu0 0.0
        %548 = vmatprep.subr.mxu0 0.0
        %549 = vmatpush1.msra.mxu0 0.0
        %550 = vmatprep.subr.mxu0 0.0
        %551 = vmatpush1.msra.mxu0 0.0
        %552 = vmatprep.subr.mxu0 0.0
        %553 = vmatpush1.msra.mxu0 0.0
        %554 = vmatprep.subr.mxu0 0.0
        %555 = vmatpush1.msra.mxu0 0.0
        %556 = vmatprep.subr.mxu0 0.0
        %557 = vmatpush1.msra.mxu0 0.0
        %558 = vmatprep.subr.mxu0 0.0
        %559 = vmatpush1.msra.mxu0 0.0
        %560 = vmatprep.subr.mxu0 0.0
        %561 = vmatpush1.msra.mxu0 0.0
        %562 = vmatprep.subr.mxu0 0.0
        %563 = vmatpush1.msra.mxu0 0.0
        %564 = vmatprep.subr.mxu0 0.0
        %565 = vmatpush1.msra.mxu0 0.0
        %566 = vmatprep.mubr.f32.mxu0 0.0
        %567 = vmatmul.mubr.f32.gmra.mrb[0].mxu0 %v358
        %v568 = vpop.f32.mrb[0].mxu0
        %v569 = vadd.f32 0.0, %v568
        %v570 = vpop.f32.mrb[0].mxu0
        %v571 = vadd.f32 0.0, %v570
        %572 = vdwg.mxu0
        %573 = vmatprep.subr.mxu0 %v349
        %574 = vmatpush1.msra.mxu0 %v348
        %575 = vmatprep.subr.mxu0 %v351
        %576 = vmatpush1.msra.mxu0 %v350
        %577 = vmatprep.subr.mxu0 0.0
        %578 = vmatpush1.msra.mxu0 0.0
        %579 = vmatprep.subr.mxu0 0.0
        %580 = vmatpush1.msra.mxu0 0.0
        %581 = vmatprep.subr.mxu0 0.0
        %582 = vmatpush1.msra.mxu0 0.0
        %583 = vmatprep.subr.mxu0 0.0
        %584 = vmatpush1.msra.mxu0 0.0
        %585 = vmatprep.subr.mxu0 0.0
        %586 = vmatpush1.msra.mxu0 0.0
        %587 = vmatprep.subr.mxu0 0.0
        %588 = vmatpush1.msra.mxu0 0.0
        %589 = vmatprep.subr.mxu0 0.0
        %590 = vmatpush1.msra.mxu0 0.0
        %591 = vmatprep.subr.mxu0 0.0
        %592 = vmatpush1.msra.mxu0 0.0
        %593 = vmatprep.subr.mxu0 0.0
        %594 = vmatpush1.msra.mxu0 0.0
        %595 = vmatprep.subr.mxu0 0.0
        %596 = vmatpush1.msra.mxu0 0.0
        %597 = vmatprep.subr.mxu0 0.0
        %598 = vmatpush1.msra.mxu0 0.0
        %599 = vmatprep.subr.mxu0 0.0
        %600 = vmatpush1.msra.mxu0 0.0
        %601 = vmatprep.subr.mxu0 0.0
        %602 = vmatpush1.msra.mxu0 0.0
        %603 = vmatprep.subr.mxu0 0.0
        %604 = vmatpush1.msra.mxu0 0.0
        %605 = vmatprep.subr.mxu0 0.0
        %606 = vmatpush1.msra.mxu0 0.0
        %607 = vmatprep.subr.mxu0 0.0
        %608 = vmatpush1.msra.mxu0 0.0
        %609 = vmatprep.subr.mxu0 0.0
        %610 = vmatpush1.msra.mxu0 0.0
        %611 = vmatprep.subr.mxu0 0.0
        %612 = vmatpush1.msra.mxu0 0.0
        %613 = vmatprep.subr.mxu0 0.0
        %614 = vmatpush1.msra.mxu0 0.0
        %615 = vmatprep.subr.mxu0 0.0
        %616 = vmatpush1.msra.mxu0 0.0
        %617 = vmatprep.subr.mxu0 0.0
        %618 = vmatpush1.msra.mxu0 0.0
        %619 = vmatprep.subr.mxu0 0.0
        %620 = vmatpush1.msra.mxu0 0.0
        %621 = vmatprep.subr.mxu0 0.0
        %622 = vmatpush1.msra.mxu0 0.0
        %623 = vmatprep.subr.mxu0 0.0
        %624 = vmatpush1.msra.mxu0 0.0
        %625 = vmatprep.subr.mxu0 0.0
        %626 = vmatpush1.msra.mxu0 0.0
        %627 = vmatprep.subr.mxu0 0.0
        %628 = vmatpush1.msra.mxu0 0.0
        %629 = vmatprep.subr.mxu0 0.0
        %630 = vmatpush1.msra.mxu0 0.0
        %631 = vmatprep.subr.mxu0 0.0
        %632 = vmatpush1.msra.mxu0 0.0
        %633 = vmatprep.subr.mxu0 0.0
        %634 = vmatpush1.msra.mxu0 0.0
        %635 = vmatprep.subr.mxu0 0.0
        %636 = vmatpush1.msra.mxu0 0.0
        %637 = vmatprep.mubr.f32.mxu0 0.0
        %638 = vmatmul.mubr.f32.gmra.mrb[0].mxu0 %v358
        %v639 = vpop.f32.mrb[0].mxu0
        %v640 = vadd.f32 0.0, %v639
        %v641 = vpop.f32.mrb[0].mxu0
        %v642 = vadd.f32 0.0, %v641
        %643 = vdwg.mxu0
        %644 = vmatprep.subr.mxu0 %v353
        %645 = vmatpush1.msra.mxu0 %v352
        %646 = vmatprep.subr.mxu0 %v355
        %647 = vmatpush1.msra.mxu0 %v354
        %648 = vmatprep.subr.mxu0 0.0
        %649 = vmatpush1.msra.mxu0 0.0
        %650 = vmatprep.subr.mxu0 0.0
        %651 = vmatpush1.msra.mxu0 0.0
        %652 = vmatprep.subr.mxu0 0.0
        %653 = vmatpush1.msra.mxu0 0.0
        %654 = vmatprep.subr.mxu0 0.0
        %655 = vmatpush1.msra.mxu0 0.0
        %656 = vmatprep.subr.mxu0 0.0
        %657 = vmatpush1.msra.mxu0 0.0
        %658 = vmatprep.subr.mxu0 0.0
        %659 = vmatpush1.msra.mxu0 0.0
        %660 = vmatprep.subr.mxu0 0.0
        %661 = vmatpush1.msra.mxu0 0.0
        %662 = vmatprep.subr.mxu0 0.0
        %663 = vmatpush1.msra.mxu0 0.0
        %664 = vmatprep.subr.mxu0 0.0
        %665 = vmatpush1.msra.mxu0 0.0
        %666 = vmatprep.subr.mxu0 0.0
        %667 = vmatpush1.msra.mxu0 0.0
        %668 = vmatprep.subr.mxu0 0.0
        %669 = vmatpush1.msra.mxu0 0.0
        %670 = vmatprep.subr.mxu0 0.0
        %671 = vmatpush1.msra.mxu0 0.0
        %672 = vmatprep.subr.mxu0 0.0
        %673 = vmatpush1.msra.mxu0 0.0
        %674 = vmatprep.subr.mxu0 0.0
        %675 = vmatpush1.msra.mxu0 0.0
        %676 = vmatprep.subr.mxu0 0.0
        %677 = vmatpush1.msra.mxu0 0.0
        %678 = vmatprep.subr.mxu0 0.0
        %679 = vmatpush1.msra.mxu0 0.0
        %680 = vmatprep.subr.mxu0 0.0
        %681 = vmatpush1.msra.mxu0 0.0
        %682 = vmatprep.subr.mxu0 0.0
        %683 = vmatpush1.msra.mxu0 0.0
        %684 = vmatprep.subr.mxu0 0.0
        %685 = vmatpush1.msra.mxu0 0.0
        %686 = vmatprep.subr.mxu0 0.0
        %687 = vmatpush1.msra.mxu0 0.0
        %688 = vmatprep.subr.mxu0 0.0
        %689 = vmatpush1.msra.mxu0 0.0
        %690 = vmatprep.subr.mxu0 0.0
        %691 = vmatpush1.msra.mxu0 0.0
        %692 = vmatprep.subr.mxu0 0.0
        %693 = vmatpush1.msra.mxu0 0.0
        %694 = vmatprep.subr.mxu0 0.0
        %695 = vmatpush1.msra.mxu0 0.0
        %696 = vmatprep.subr.mxu0 0.0
        %697 = vmatpush1.msra.mxu0 0.0
        %698 = vmatprep.subr.mxu0 0.0
        %699 = vmatpush1.msra.mxu0 0.0
        %700 = vmatprep.subr.mxu0 0.0
        %701 = vmatpush1.msra.mxu0 0.0
        %702 = vmatprep.subr.mxu0 0.0
        %703 = vmatpush1.msra.mxu0 0.0
        %704 = vmatprep.subr.mxu0 0.0
        %705 = vmatpush1.msra.mxu0 0.0
        %706 = vmatprep.subr.mxu0 0.0
        %707 = vmatpush1.msra.mxu0 0.0
        %708 = vmatprep.mubr.f32.mxu0 0.0
        %709 = vmatmul.mubr.f32.gmra.mrb[0].mxu0 %v358
        %v710 = vpop.f32.mrb[0].mxu0
        %v711 = vadd.f32 0.0, %v710
        %v712 = vpop.f32.mrb[0].mxu0
        %v713 = vadd.f32 0.0, %v712
        %714 = vdwg.mxu0
        %715 = vmatprep.subr.mxu0 0.0
        %716 = vmatpush1.msra.mxu0 %v284
        %717 = vmatprep.subr.mxu0 0.0
        %718 = vmatpush1.msra.mxu0 %v285
        %719 = vmatprep.subr.mxu0 0.0
        %720 = vmatpush1.msra.mxu0 %v286
        %721 = vmatprep.subr.mxu0 0.0
        %722 = vmatpush1.msra.mxu0 %v287
        %723 = vmatprep.subr.mxu0 0.0
        %724 = vmatpush1.msra.mxu0 %v288
        %725 = vmatprep.subr.mxu0 0.0
        %726 = vmatpush1.msra.mxu0 %v289
        %727 = vmatprep.subr.mxu0 0.0
        %728 = vmatpush1.msra.mxu0 %v290
        %729 = vmatprep.subr.mxu0 0.0
        %730 = vmatpush1.msra.mxu0 %v291
        %731 = vmatprep.subr.mxu0 0.0
        %732 = vmatpush1.msra.mxu0 %v292
        %733 = vmatprep.subr.mxu0 0.0
        %734 = vmatpush1.msra.mxu0 %v293
        %735 = vmatprep.subr.mxu0 0.0
        %736 = vmatpush1.msra.mxu0 %v294
        %737 = vmatprep.subr.mxu0 0.0
        %738 = vmatpush1.msra.mxu0 %v295
        %739 = vmatprep.subr.mxu0 0.0
        %740 = vmatpush1.msra.mxu0 %v296
        %741 = vmatprep.subr.mxu0 0.0
        %742 = vmatpush1.msra.mxu0 %v297
        %743 = vmatprep.subr.mxu0 0.0
        %744 = vmatpush1.msra.mxu0 %v298
        %745 = vmatprep.subr.mxu0 0.0
        %746 = vmatpush1.msra.mxu0 %v299
        %747 = vmatprep.subr.mxu0 0.0
        %748 = vmatpush1.msra.mxu0 %v300
        %749 = vmatprep.subr.mxu0 0.0
        %750 = vmatpush1.msra.mxu0 %v301
        %751 = vmatprep.subr.mxu0 0.0
        %752 = vmatpush1.msra.mxu0 %v302
        %753 = vmatprep.subr.mxu0 0.0
        %754 = vmatpush1.msra.mxu0 %v303
        %755 = vmatprep.subr.mxu0 0.0
        %756 = vmatpush1.msra.mxu0 %v304
        %757 = vmatprep.subr.mxu0 0.0
        %758 = vmatpush1.msra.mxu0 %v305
        %759 = vmatprep.subr.mxu0 0.0
        %760 = vmatpush1.msra.mxu0 %v306
        %761 = vmatprep.subr.mxu0 0.0
        %762 = vmatpush1.msra.mxu0 %v307
        %763 = vmatprep.subr.mxu0 0.0
        %764 = vmatpush1.msra.mxu0 %v308
        %765 = vmatprep.subr.mxu0 0.0
        %766 = vmatpush1.msra.mxu0 %v309
        %767 = vmatprep.subr.mxu0 0.0
        %768 = vmatpush1.msra.mxu0 %v310
        %769 = vmatprep.subr.mxu0 0.0
        %770 = vmatpush1.msra.mxu0 %v311
        %771 = vmatprep.subr.mxu0 0.0
        %772 = vmatpush1.msra.mxu0 %v312
        %773 = vmatprep.subr.mxu0 0.0
        %774 = vmatpush1.msra.mxu0 %v313
        %775 = vmatprep.subr.mxu0 0.0
        %776 = vmatpush1.msra.mxu0 %v314
        %777 = vmatprep.subr.mxu0 0.0
        %778 = vmatpush1.msra.mxu0 %v315
        %779 = vmatprep.mubr.f32.mxu0 %v429
        %780 = vmatmul.mubr.f32.gmra.mrb[0].mxu0 %v427
        %v781 = vpop.f32.mrb[0].mxu0
        %v782 = vadd.f32 0.0, %v781
        %v783 = vpop.f32.mrb[0].mxu0
        %784 = vmatprep.mubr.f32.mxu0 %v500
        %785 = vmatmul.mubr.f32.gmra.mrb[0].mxu0 %v498
        %v786 = vpop.f32.mrb[0].mxu0
        %v787 = vadd.f32 0.0, %v786
        %v788 = vpop.f32.mrb[0].mxu0
        %789 = vmatprep.mubr.f32.mxu0 %v571
        %790 = vmatmul.mubr.f32.gmra.mrb[0].mxu0 %v569
        %v791 = vpop.f32.mrb[0].mxu0
        %v792 = vadd.f32 0.0, %v791
        %v793 = vpop.f32.mrb[0].mxu0
        %794 = vmatprep.mubr.f32.mxu0 %v642
        %795 = vmatmul.mubr.f32.gmra.mrb[0].mxu0 %v640
        %v796 = vpop.f32.mrb[0].mxu0
        %v797 = vadd.f32 0.0, %v796
        %v798 = vpop.f32.mrb[0].mxu0
        %799 = vmatprep.mubr.f32.mxu0 %v713
        %800 = vmatmul.mubr.f32.gmra.mrb[0].mxu0 %v711
        %v801 = vpop.f32.mrb[0].mxu0
        %v802 = vadd.f32 0.0, %v801
        %v803 = vpop.f32.mrb[0].mxu0
        %804 = vdwg.mxu0
        %v805 = vmul.f32 %v782, %v782
        %v806 = vmul.f32 %v787, %v787
        %v807 = vmul.f32 %v782, %v787
        %v808 = vsub.f32 %v792, %v805
        %v809 = vsub.f32 %v797, %v806
        %v810 = vsub.f32 %v802, %v807
        %v811 = vmul.f32 %v807, 2.0
        %v812 = vadd.f32 %v811, 6.5025
        %v813 = vmul.f32 %v810, 2.0
        %v814 = vadd.f32 %v813, 58.5225
        %v815 = vmax.f32 %v814, 0.0
        %v816 = vmul.f32 %v812, %v815
        %v817 = vadd.f32 %v805, %v806
        %v818 = vadd.f32 %v817, 6.5025
        %v819 = vadd.f32 %v808, %v809
        %v820 = vadd.f32 %v819, 58.5225
        %v821 = vmul.f32 %v818, %v820
        %v822 = vrcp.pop %v821
        %v823 = vmul.f32 %v816, %v822
        %vm824 = vcmp.lt.s32.totalorder %v317, 6
        %vm825 = vcmp.lt.s32.totalorder %v319, 6
        %vm826 = vmand %vm824, %vm825
        %v827 = vsel %vm826, %v823, 0.0
        %828 = vadd.xlane.f32.xlu0 %v827
        %v829 = vpop.xlane.xlu0 %828
        %v830 = vrot.slane %v829, 4
        %v831 = vadd.f32 %v829, %v830
        %v832 = vrot.slane %v831, 2
        %v833 = vadd.f32 %v831, %v832
        %v834 = vrot.slane %v833, 1
        %v835 = vadd.f32 %v833, %v834
        %v836 = vadd.f32 %v835, 0.0
        %v837 = vmul.f32 %v836, 0.027777778
        %838 = vst [vmem:[%s282] sm:$0xff] %v837
        %s839 = sand.u32 %s127, 1
        %s840 = scalar_lea.sflag [#allocation4], %s839
        %s841 = sand.u32 %s127, 1
        %s842 = smul.addr %s841, 8
        %s843 = scalar_lea.vmem [#allocation10], %s842
        // Predicated region
        $region53: #{tpu_custom_call.1} parent=35 // pred_check
          %p844 = pneg %p137
        $region54: #{tpu_custom_call.1} parent=35 // pred_check_branch
          %846 = sbr.rel (%p844) target = $region56
        $region55: #{tpu_custom_call.1} parent=35 // pred_region
          %s848 = ssub.s32 128, 128
          %849 = vsyncadd %s840, %s848
          %s850 = smul.addr %s25, 128
          %s851 = scalar_lea.hbm %s4, %s850
          %s853 = sshll.u32 %s843, 4
          %s854 = int_to_ptr.vmem [resolvable:$true] %s853
          %856 = dma.vmem_to_hbm [thread:$0]  %s854, 128, %s851, %s840
        $region56: #{tpu_custom_call.1} parent=35 // pred_fallthru
          _
      $region36: #{tpu_custom_call.1} parent=5 // pred_fallthru
        _
      %p857 = scmp.le.s32.totalorder 2, %s20
      // Predicated region
      $region57: #{tpu_custom_call.1} parent=5 // pred_check
        %p858 = pneg %p857
      $region58: #{tpu_custom_call.1} parent=5 // pred_check_branch
        %860 = sbr.rel (%p858) target = $region60
      $region59: #{tpu_custom_call.1} parent=5 // pred_region
        %s861 = ssub.s32 %s20, 2
        // Predicated region
        $region61: #{tpu_custom_call.1} parent=59 // pred_check
          %p862 = pneg %p143
        $region62: #{tpu_custom_call.1} parent=59 // pred_check_branch
          %864 = sbr.rel (%p862) target = $region64
        $region63: #{tpu_custom_call.1} parent=59 // pred_region
          %s865 = sand.u32 %s128, 1
          %s866 = scalar_lea.sflag [#allocation4], %s865
          %s867 = sand.u32 %s128, 1
          %s868 = smul.addr %s867, 8
          %s869 = scalar_lea.vmem [#allocation10], %s868
          %870 = dma.done %s866, 128
        $region64: #{tpu_custom_call.1} parent=59 // pred_fallthru
          _
      $region60: #{tpu_custom_call.1} parent=5 // pred_fallthru
        _
    $region6: #{tpu_custom_call.1} parent=1 // loop_footer
      %s24 = sadd.s32 1, %s20
    $region7: #{tpu_custom_call.1} parent=1 // loop_footer_branch
      %19 = sbr.rel target = $region3
    $region8: #{tpu_custom_call.1} parent=1 // loop_exit
      _
    %871 = vsyncpa [#allocation3], 1
    %s872 = scalar_lea.sflag [#allocation3], 1
    %873 = vsyncpa %s872, 1
    %874 = vsyncpa [#allocation6], 1
    %s875 = scalar_lea.sflag [#allocation6], 1
    %876 = vsyncpa %s875, 1
    %877 = vsyncpa [#allocation9], 1
    %878 = vsyncpa [#allocation4], 1
    %s879 = scalar_lea.sflag [#allocation4], 1
    %880 = vsyncpa %s879, 1

// kernel: tpu_custom_call.1
$region0: #{tpu_custom_call.1}
  #allocation0 [shape = 'u32[]', space=smem, size = 0x4, offset = 0x4, fixed_abs, tag = 'smem constant byte address 0x4 - core index']
  #allocation1 [shape = 'u32[144,128]{1,0:T(1,128)}', space=vmem, size = 0x12000, scoped, tag = 'internal scratch']
  %s0 = inlined_call_operand.hbm [shape: f32[2,16,256], index: 0, kind: input, shape index: {}]
  %s1 = inlined_call_operand.hbm [shape: f32[2,16,256], index: 1, kind: input, shape index: {}]
  %s2 = inlined_call_operand.hbm [shape: f32[8,16], index: 2, kind: input, shape index: {}]
  %s3 = inlined_call_operand.hbm [shape: f32[256,128], index: 3, kind: input, shape index: {}]
  %s4 = inlined_call_operand.hbm [shape: f32[2,8,128], index: 4, kind: output, shape index: {}]
  %s5 = sld [smem:[#allocation0]]
  $region65: #{tpu_custom_call.1} parent=0
    _
  %s7 = ssub.s32 1, %s5
  %s8 = scalar_select 0, %s7, %s5
  $region1: #{tpu_custom_call.1} parent=0
    #allocation2 [shape = 'u8[32768]{0}', space=vmem, size = 0x8000, scoped, tag = 'input window, operand 0']
    #allocation3 [shape = 's32[2]{0}', space=sflag, size = 0x8, scoped, tag = 'scoped memory for tpu_custom_call.1']
    #allocation4 [shape = 's32[2]{0}', space=sflag, size = 0x8, scoped, tag = 'scoped memory for tpu_custom_call.1']
    #allocation5 [shape = 'u8[32768]{0}', space=vmem, size = 0x8000, scoped, tag = 'input window, operand 1']
    #allocation6 [shape = 's32[2]{0}', space=sflag, size = 0x8, scoped, tag = 'scoped memory for tpu_custom_call.1']
    #allocation7 [shape = 'u8[4096]{0}', space=vmem, size = 0x1000, scoped, tag = 'input window, operand 2, single buffered']
    #allocation8 [shape = 'u8[131072]{0}', space=vmem, size = 0x20000, scoped, tag = 'input window, operand 3, single buffered']
    #allocation9 [shape = 's32[1]{0}', space=sflag, size = 0x4, scoped, tag = 'scoped memory for tpu_custom_call.1']
    #allocation10 [shape = 'u8[8192]{0}', space=vmem, size = 0x2000, scoped, tag = 'output window, operand 0']
    %9 = vsyncpa [#allocation3], 0
    %s10 = scalar_lea.sflag [#allocation3], 1
    %11 = vsyncpa %s10, 0
    %12 = vsyncpa [#allocation6], 0
    %s13 = scalar_lea.sflag [#allocation6], 1
    %14 = vsyncpa %s13, 0
    %15 = vsyncpa [#allocation9], 0
    %16 = vsyncpa [#allocation4], 0
    %s17 = scalar_lea.sflag [#allocation4], 1
    %18 = vsyncpa %s17, 0
    loop: start=0, step=1, limit=4
    $region2: #{tpu_custom_call.1} parent=1 // loop_pre_header
      _
    $region3: #{tpu_custom_call.1} parent=1 // loop_header
      %s20 = sphi 0, %s24
      %p21 = scmp.ge.s32.totalorder %s20, 4
      %s30 = sphi 0, %s32
      %s33 = sphi 0, %s30
      %s34 = sphi 0, %s33
      %s50 = sphi 0, %s34
      %s56 = sphi 0, %s58
      %s59 = sphi 0, %s56
      %s60 = sphi 0, %s59
      %s76 = sphi 0, %s60
      %s80 = sphi 0, %s80
      %s82 = sphi 0, %s80
      %s83 = sphi 0, %s82
      %s97 = sphi 0, %s83
      %s101 = sphi 0, %s101
      %s103 = sphi 0, %s101
      %s104 = sphi 0, %s103
      %s118 = sphi 0, %s104
      %s124 = sphi 0, %s126
      %s127 = sphi 0, %s124
      %s128 = sphi 0, %s127
      %s144 = sphi 0, %s128
    $region4: #{tpu_custom_call.1} parent=1 // loop_header_branch
      %23 = sbr.rel (%p21) target = $region8
    $region5: #{tpu_custom_call.1} parent=1 // loop_body
      %s25 = ssub.s32 %s20, 1
      %s26 = ssub.s32 %s20, 2
      %s27 = sadd.s32 %s20, 1
      %s28 = ssub.s32 %s20, %s27
      %p29 = scmp.eq.s32.totalorder %s28, 0
      %s31 = sadd.s32 %s30, 1
      %s32 = scalar_select %p29, %s30, %s31
      %p35 = pneg %p29
      %p36 = scmp.eq.s32.totalorder %s20, 1
      %p37 = por %p35, %p36
      %p38 = scmp.ne.s32.totalorder %s30, %s33
      %p39 = scmp.eq.s32.totalorder %s20, 0
      %p40 = por %p38, %p39
      %p41 = scmp.ne.s32.totalorder %s30, %s33
      %p42 = scmp.eq.s32.totalorder %s25, 1
      %p43 = por %p41, %p42
      %p44 = scmp.ne.s32.totalorder %s33, %s34
      %p45 = scmp.eq.s32.totalorder %s25, 0
      %p46 = por %p44, %p45
      %p47 = scmp.ne.s32.totalorder %s33, %s34
      %p48 = scmp.eq.s32.totalorder %s26, 1
      %p49 = por %p47, %p48
      %p51 = scmp.ne.s32.totalorder %s34, %s50
      %p52 = scmp.eq.s32.totalorder %s26, 0
      %p53 = por %p51, %p52
      %s54 = ssub.s32 %s20, %s27
      %p55 = scmp.eq.s32.totalorder %s54, 0
      %s57 = sadd.s32 %s56, 1
      %s58 = scalar_select %p55, %s56, %s57
      %p61 = pneg %p55
      %p62 = scmp.eq.s32.totalorder %s20, 1
      %p63 = por %p61, %p62
      %p64 = scmp.ne.s32.totalorder %s56, %s59
      %p65 = scmp.eq.s32.totalorder %s20, 0
      %p66 = por %p64, %p65
      %p67 = scmp.ne.s32.totalorder %s56, %s59
      %p68 = scmp.eq.s32.totalorder %s25, 1
      %p69 = por %p67, %p68
      %p70 = scmp.ne.s32.totalorder %s59, %s60
      %p71 = scmp.eq.s32.totalorder %s25, 0
      %p72 = por %p70, %p71
      %p73 = scmp.ne.s32.totalorder %s59, %s60
      %p74 = scmp.eq.s32.totalorder %s26, 1
      %p75 = por %p73, %p74
      %p77 = scmp.ne.s32.totalorder %s60, %s76
      %p78 = scmp.eq.s32.totalorder %s26, 0
      %p79 = por %p77, %p78
      %s81 = sadd.s32 %s80, 1
      %p84 = scmp.eq.s32.totalorder %s20, 1
      %p85 = scmp.ne.s32.totalorder %s80, %s82
      %p86 = scmp.eq.s32.totalorder %s20, 0
      %p87 = por %p85, %p86
      %p88 = scmp.ne.s32.totalorder %s80, %s82
      %p89 = scmp.eq.s32.totalorder %s25, 1
      %p90 = por %p88, %p89
      %p91 = scmp.ne.s32.totalorder %s82, %s83
      %p92 = scmp.eq.s32.totalorder %s25, 0
      %p93 = por %p91, %p92
      %p94 = scmp.ne.s32.totalorder %s82, %s83
      %p95 = scmp.eq.s32.totalorder %s26, 1
      %p96 = por %p94, %p95
      %p98 = scmp.ne.s32.totalorder %s83, %s97
      %p99 = scmp.eq.s32.totalorder %s26, 0
      %p100 = por %p98, %p99
      %s102 = sadd.s32 %s101, 1
      %p105 = scmp.eq.s32.totalorder %s20, 1
      %p106 = scmp.ne.s32.totalorder %s101, %s103
      %p107 = scmp.eq.s32.totalorder %s20, 0
      %p108 = por %p106, %p107
      %p109 = scmp.ne.s32.totalorder %s101, %s103
      %p110 = scmp.eq.s32.totalorder %s25, 1
      %p111 = por %p109, %p110
      %p112 = scmp.ne.s32.totalorder %s103, %s104
      %p113 = scmp.eq.s32.totalorder %s25, 0
      %p114 = por %p112, %p113
      %p115 = scmp.ne.s32.totalorder %s103, %s104
      %p116 = scmp.eq.s32.totalorder %s26, 1
      %p117 = por %p115, %p116
      %p119 = scmp.ne.s32.totalorder %s104, %s118
      %p120 = scmp.eq.s32.totalorder %s26, 0
      %p121 = por %p119, %p120
      %s122 = ssub.s32 %s20, %s27
      %p123 = scmp.eq.s32.totalorder %s122, 0
      %s125 = sadd.s32 %s124, 1
      %s126 = scalar_select %p123, %s124, %s125
      %p129 = pneg %p123
      %p130 = scmp.eq.s32.totalorder %s20, 1
      %p131 = por %p129, %p130
      %p132 = scmp.ne.s32.totalorder %s124, %s127
      %p133 = scmp.eq.s32.totalorder %s20, 0
      %p134 = por %p132, %p133
      %p135 = scmp.ne.s32.totalorder %s124, %s127
      %p136 = scmp.eq.s32.totalorder %s25, 1
      %p137 = por %p135, %p136
      %p138 = scmp.ne.s32.totalorder %s127, %s128
      %p139 = scmp.eq.s32.totalorder %s25, 0
      %p140 = por %p138, %p139
      %p141 = scmp.ne.s32.totalorder %s127, %s128
      %p142 = scmp.eq.s32.totalorder %s26, 1
      %p143 = por %p141, %p142
      %p145 = scmp.ne.s32.totalorder %s128, %s144
      %p146 = scmp.eq.s32.totalorder %s26, 0
      %p147 = por %p145, %p146
      %p148 = scmp.le.s32.totalorder 1, %s20
      %p149 = scmp.lt.s32.totalorder %s20, 3
      %p150 = pnand %p148, %p149
      %p151 = pneg %p150
      // Predicated region
      $region9: #{tpu_custom_call.1} parent=5 // pred_check
        _
      $region10: #{tpu_custom_call.1} parent=5 // pred_check_branch
        %153 = sbr.rel (%p150) target = $region12
      $region11: #{tpu_custom_call.1} parent=5 // pred_region
        %s154 = ssub.s32 %s20, 1
        // Predicated region
        $region13: #{tpu_custom_call.1} parent=11 // pred_check
          %p155 = pneg %p93
        $region14: #{tpu_custom_call.1} parent=11 // pred_check_branch
          %157 = sbr.rel (%p155) target = $region16
        $region15: #{tpu_custom_call.1} parent=11 // pred_region
          %s159 = ssub.s32 128, 128
          %160 = vsyncadd [#allocation6], %s159
          %s162 = sshll.u32 [#allocation7], 4
          %s163 = int_to_ptr.vmem [resolvable:$true] %s162
          %165 = dma.hbm_to_vmem [thread:$0]  %s2, 128, %s163, [#allocation6]
        $region16: #{tpu_custom_call.1} parent=11 // pred_fallthru
          _
        // Predicated region
        $region17: #{tpu_custom_call.1} parent=11 // pred_check
          %p166 = pneg %p114
        $region18: #{tpu_custom_call.1} parent=11 // pred_check_branch
          %168 = sbr.rel (%p166) target = $region20
        $region19: #{tpu_custom_call.1} parent=11 // pred_region
          %s170 = ssub.s32 4096, 4096
          %171 = vsyncadd [#allocation9], %s170
          %s172 = sshll.u32 [#allocation8], 4
          %s173 = int_to_ptr.vmem [resolvable:$true] %s172
          %178 = dma.hbm_to_vmem [thread:$0]  %s3, 4096, %s173, [#allocation9], 128, 128, 8
        $region20: #{tpu_custom_call.1} parent=11 // pred_fallthru
          _
      $region12: #{tpu_custom_call.1} parent=5 // pred_fallthru
        _
      %p179 = scmp.lt.s32.totalorder %s20, 2
      // Predicated region
      $region21: #{tpu_custom_call.1} parent=5 // pred_check
        %p180 = pneg %p179
      $region22: #{tpu_custom_call.1} parent=5 // pred_check_branch
        %182 = sbr.rel (%p180) target = $region24
      $region23: #{tpu_custom_call.1} parent=5 // pred_region
        // Predicated region
        $region25: #{tpu_custom_call.1} parent=23 // pred_check
          %p183 = pneg %p40
        $region26: #{tpu_custom_call.1} parent=23 // pred_check_branch
          %185 = sbr.rel (%p183) target = $region28
        $region27: #{tpu_custom_call.1} parent=23 // pred_region
          %s186 = sand.u32 %s30, 1
          %s187 = scalar_lea.sflag [#allocation3], %s186
          %s188 = sand.u32 %s30, 1
          %s189 = smul.addr %s188, 32
          %s190 = scalar_lea.vmem [#allocation2], %s189
          %s192 = ssub.s32 512, 512
          %193 = vsyncadd %s187, %s192
          %s194 = smul.addr %s20, 4
          %s195 = smul.addr %s194, 128
          %s196 = scalar_lea.hbm %s0, %s195
          %s197 = sshll.u32 %s190, 4
          %s198 = int_to_ptr.vmem [resolvable:$true] %s197
          %203 = dma.hbm_to_vmem [thread:$0]  %s196, 512, %s198, %s187, 256, 256, 16
        $region28: #{tpu_custom_call.1} parent=23 // pred_fallthru
          _
        // Predicated region
        $region29: #{tpu_custom_call.1} parent=23 // pred_check
          %p204 = pneg %p66
        $region30: #{tpu_custom_call.1} parent=23 // pred_check_branch
          %206 = sbr.rel (%p204) target = $region32
        $region31: #{tpu_custom_call.1} parent=23 // pred_region
          %s207 = sand.u32 %s20, 1
          %s208 = scalar_lea.sflag [#allocation6], %s207
          %s209 = sand.u32 %s56, 1
          %s210 = smul.addr %s209, 32
          %s211 = scalar_lea.vmem [#allocation5], %s210
          %s213 = ssub.s32 512, 512
          %214 = vsyncadd %s208, %s213
          %s215 = smul.addr %s20, 4
          %s216 = smul.addr %s215, 128
          %s217 = scalar_lea.hbm %s1, %s216
          %s218 = sshll.u32 %s211, 4
          %s219 = int_to_ptr.vmem [resolvable:$true] %s218
          %224 = dma.hbm_to_vmem [thread:$0]  %s217, 512, %s219, %s208, 256, 256, 16
        $region32: #{tpu_custom_call.1} parent=23 // pred_fallthru
          _
      $region24: #{tpu_custom_call.1} parent=5 // pred_fallthru
        _
      %p225 = scmp.le.s32.totalorder 1, %s20
      %p226 = scmp.lt.s32.totalorder %s20, 3
      %p227 = pnand %p225, %p226
      %p228 = pneg %p227
      // Predicated region
      $region33: #{tpu_custom_call.1} parent=5 // pred_check
        _
      $region34: #{tpu_custom_call.1} parent=5 // pred_check_branch
        %230 = sbr.rel (%p227) target = $region36
      $region35: #{tpu_custom_call.1} parent=5 // pred_region
        %s231 = ssub.s32 %s20, 1
        %s232 = sand.u32 %s33, 1
        %s233 = scalar_lea.sflag [#allocation3], %s232
        %s234 = sand.u32 %s33, 1
        %s235 = smul.addr %s234, 32
        %s236 = scalar_lea.vmem [#allocation2], %s235
        // Predicated region
        $region37: #{tpu_custom_call.1} parent=35 // pred_check
          %p237 = pneg %p46
        $region38: #{tpu_custom_call.1} parent=35 // pred_check_branch
          %239 = sbr.rel (%p237) target = $region40
        $region39: #{tpu_custom_call.1} parent=35 // pred_region
          %240 = dma.done %s233, 512
        $region40: #{tpu_custom_call.1} parent=35 // pred_fallthru
          _
        %s241 = sand.u32 %s25, 1
        %s242 = scalar_lea.sflag [#allocation6], %s241
        %s243 = sand.u32 %s59, 1
        %s244 = smul.addr %s243, 32
        %s245 = scalar_lea.vmem [#allocation5], %s244
        // Predicated region
        $region41: #{tpu_custom_call.1} parent=35 // pred_check
          %p246 = pneg %p72
        $region42: #{tpu_custom_call.1} parent=35 // pred_check_branch
          %248 = sbr.rel (%p246) target = $region44
        $region43: #{tpu_custom_call.1} parent=35 // pred_region
          %249 = dma.done %s242, 512
        $region44: #{tpu_custom_call.1} parent=35 // pred_fallthru
          _
        // Predicated region
        $region45: #{tpu_custom_call.1} parent=35 // pred_check
          %p250 = pneg %p93
        $region46: #{tpu_custom_call.1} parent=35 // pred_check_branch
          %252 = sbr.rel (%p250) target = $region48
        $region47: #{tpu_custom_call.1} parent=35 // pred_region
          %253 = dma.done [#allocation6], 128
        $region48: #{tpu_custom_call.1} parent=35 // pred_fallthru
          _
        // Predicated region
        $region49: #{tpu_custom_call.1} parent=35 // pred_check
          %p254 = pneg %p114
        $region50: #{tpu_custom_call.1} parent=35 // pred_check_branch
          %256 = sbr.rel (%p254) target = $region52
        $region51: #{tpu_custom_call.1} parent=35 // pred_region
          %257 = dma.done [#allocation9], 4096
        $region52: #{tpu_custom_call.1} parent=35 // pred_fallthru
          _
        %s258 = sand.u32 %s33, 1
        %s259 = scalar_lea.sflag [#allocation3], %s258
        %s260 = sand.u32 %s33, 1
        %s261 = smul.addr %s260, 32
        %s262 = scalar_lea.vmem [#allocation2], %s261
        %p263 = pneg %p46
        %p264 = pneg %p43
        %s265 = sand.u32 %s25, 1
        %s266 = scalar_lea.sflag [#allocation6], %s265
        %s267 = sand.u32 %s59, 1
        %s268 = smul.addr %s267, 32
        %s269 = scalar_lea.vmem [#allocation5], %s268
        %p270 = pneg %p72
        %p271 = pneg %p69
        %p272 = pneg %p93
        %p273 = pneg %p90
        %p274 = pneg %p114
        %p275 = pneg %p111
        %p276 = pneg %p140
        %p277 = pneg %p137
        %s278 = sand.u32 %s127, 1
        %s279 = scalar_lea.sflag [#allocation4], %s278
        %s280 = sand.u32 %s127, 1
        %s281 = smul.addr %s280, 8
        %s282 = scalar_lea.vmem [#allocation10], %s281
        %v283 = vld [vmem:[#allocation7] sm:$0xff]
        %v284 = vld [vmem:[#allocation8] sm:$0xff]
        %v285 = vld [vmem:[#allocation8 + $0x8] sm:$0xff]
        %v286 = vld [vmem:[#allocation8 + $0x10] sm:$0xff]
        %v287 = vld [vmem:[#allocation8 + $0x18] sm:$0xff]
        %v288 = vld [vmem:[#allocation8 + $0x20] sm:$0xff]
        %v289 = vld [vmem:[#allocation8 + $0x28] sm:$0xff]
        %v290 = vld [vmem:[#allocation8 + $0x30] sm:$0xff]
        %v291 = vld [vmem:[#allocation8 + $0x38] sm:$0xff]
        %v292 = vld [vmem:[#allocation8 + $0x40] sm:$0xff]
        %v293 = vld [vmem:[#allocation8 + $0x48] sm:$0xff]
        %v294 = vld [vmem:[#allocation8 + $0x50] sm:$0xff]
        %v295 = vld [vmem:[#allocation8 + $0x58] sm:$0xff]
        %v296 = vld [vmem:[#allocation8 + $0x60] sm:$0xff]
        %v297 = vld [vmem:[#allocation8 + $0x68] sm:$0xff]
        %v298 = vld [vmem:[#allocation8 + $0x70] sm:$0xff]
        %v299 = vld [vmem:[#allocation8 + $0x78] sm:$0xff]
        %v300 = vld [vmem:[#allocation8 + $0x80] sm:$0xff]
        %v301 = vld [vmem:[#allocation8 + $0x88] sm:$0xff]
        %v302 = vld [vmem:[#allocation8 + $0x90] sm:$0xff]
        %v303 = vld [vmem:[#allocation8 + $0x98] sm:$0xff]
        %v304 = vld [vmem:[#allocation8 + $0xa0] sm:$0xff]
        %v305 = vld [vmem:[#allocation8 + $0xa8] sm:$0xff]
        %v306 = vld [vmem:[#allocation8 + $0xb0] sm:$0xff]
        %v307 = vld [vmem:[#allocation8 + $0xb8] sm:$0xff]
        %v308 = vld [vmem:[#allocation8 + $0xc0] sm:$0xff]
        %v309 = vld [vmem:[#allocation8 + $0xc8] sm:$0xff]
        %v310 = vld [vmem:[#allocation8 + $0xd0] sm:$0xff]
        %v311 = vld [vmem:[#allocation8 + $0xd8] sm:$0xff]
        %v312 = vld [vmem:[#allocation8 + $0xe0] sm:$0xff]
        %v313 = vld [vmem:[#allocation8 + $0xe8] sm:$0xff]
        %v314 = vld [vmem:[#allocation8 + $0xf0] sm:$0xff]
        %v315 = vld [vmem:[#allocation8 + $0xf8] sm:$0xff]
        %v316 = vlaneseq
        %v317 = vshrl.u32 %v316, 7
        %v318 = vlaneseq
        %v319 = vand.u32 %v318, 127
        %v320 = vld [vmem:[%s236] sm:$0xff]
        %v321 = vld [vmem:[%s236 + $0x8] sm:$0xff]
        %v322 = vld [vmem:[%s236 + $0x10] sm:$0xff]
        %v323 = vld [vmem:[%s236 + $0x18] sm:$0xff]
        %v324 = vmul.f32 %v320, 255.0
        %v325 = vmul.f32 %v321, 255.0
        %v326 = vmul.f32 %v322, 255.0
        %v327 = vmul.f32 %v323, 255.0
        %v328 = vround.ne.pseudo %v324
        %v329 = vround.ne.pseudo %v325
        %v330 = vround.ne.pseudo %v326
        %v331 = vround.ne.pseudo %v327
        %v332 = vld [vmem:[%s245] sm:$0xff]
        %v333 = vld [vmem:[%s245 + $0x8] sm:$0xff]
        %v334 = vld [vmem:[%s245 + $0x10] sm:$0xff]
        %v335 = vld [vmem:[%s245 + $0x18] sm:$0xff]
        %v336 = vmul.f32 %v332, 255.0
        %v337 = vmul.f32 %v333, 255.0
        %v338 = vmul.f32 %v334, 255.0
        %v339 = vmul.f32 %v335, 255.0
        %v340 = vround.ne.pseudo %v336
        %v341 = vround.ne.pseudo %v337
        %v342 = vround.ne.pseudo %v338
        %v343 = vround.ne.pseudo %v339
        %v344 = vmul.f32 %v328, %v328
        %v345 = vmul.f32 %v329, %v329
        %v346 = vmul.f32 %v330, %v330
        %v347 = vmul.f32 %v331, %v331
        %v348 = vmul.f32 %v340, %v340
        %v349 = vmul.f32 %v341, %v341
        %v350 = vmul.f32 %v342, %v342
        %v351 = vmul.f32 %v343, %v343
        %v352 = vmul.f32 %v328, %v340
        %v353 = vmul.f32 %v329, %v341
        %v354 = vmul.f32 %v330, %v342
        %v355 = vmul.f32 %v331, %v343
        %vm356 = vcmask 130048
        %v358 = vsel %vm356, %v283, 0
        %360 = vmatprep.subr.mxu0 %v329
        %361 = vmatpush1.msra.mxu0 %v328
        %362 = vmatprep.subr.mxu0 %v331
        %363 = vmatpush1.msra.mxu0 %v330
        %364 = vmatprep.subr.mxu0 0.0
        %365 = vmatpush1.msra.mxu0 0.0
        %366 = vmatprep.subr.mxu0 0.0
        %367 = vmatpush1.msra.mxu0 0.0
        %368 = vmatprep.subr.mxu0 0.0
        %369 = vmatpush1.msra.mxu0 0.0
        %370 = vmatprep.subr.mxu0 0.0
        %371 = vmatpush1.msra.mxu0 0.0
        %372 = vmatprep.subr.mxu0 0.0
        %373 = vmatpush1.msra.mxu0 0.0
        %374 = vmatprep.subr.mxu0 0.0
        %375 = vmatpush1.msra.mxu0 0.0
        %376 = vmatprep.subr.mxu0 0.0
        %377 = vmatpush1.msra.mxu0 0.0
        %378 = vmatprep.subr.mxu0 0.0
        %379 = vmatpush1.msra.mxu0 0.0
        %380 = vmatprep.subr.mxu0 0.0
        %381 = vmatpush1.msra.mxu0 0.0
        %382 = vmatprep.subr.mxu0 0.0
        %383 = vmatpush1.msra.mxu0 0.0
        %384 = vmatprep.subr.mxu0 0.0
        %385 = vmatpush1.msra.mxu0 0.0
        %386 = vmatprep.subr.mxu0 0.0
        %387 = vmatpush1.msra.mxu0 0.0
        %388 = vmatprep.subr.mxu0 0.0
        %389 = vmatpush1.msra.mxu0 0.0
        %390 = vmatprep.subr.mxu0 0.0
        %391 = vmatpush1.msra.mxu0 0.0
        %392 = vmatprep.subr.mxu0 0.0
        %393 = vmatpush1.msra.mxu0 0.0
        %394 = vmatprep.subr.mxu0 0.0
        %395 = vmatpush1.msra.mxu0 0.0
        %396 = vmatprep.subr.mxu0 0.0
        %397 = vmatpush1.msra.mxu0 0.0
        %398 = vmatprep.subr.mxu0 0.0
        %399 = vmatpush1.msra.mxu0 0.0
        %400 = vmatprep.subr.mxu0 0.0
        %401 = vmatpush1.msra.mxu0 0.0
        %402 = vmatprep.subr.mxu0 0.0
        %403 = vmatpush1.msra.mxu0 0.0
        %404 = vmatprep.subr.mxu0 0.0
        %405 = vmatpush1.msra.mxu0 0.0
        %406 = vmatprep.subr.mxu0 0.0
        %407 = vmatpush1.msra.mxu0 0.0
        %408 = vmatprep.subr.mxu0 0.0
        %409 = vmatpush1.msra.mxu0 0.0
        %410 = vmatprep.subr.mxu0 0.0
        %411 = vmatpush1.msra.mxu0 0.0
        %412 = vmatprep.subr.mxu0 0.0
        %413 = vmatpush1.msra.mxu0 0.0
        %414 = vmatprep.subr.mxu0 0.0
        %415 = vmatpush1.msra.mxu0 0.0
        %416 = vmatprep.subr.mxu0 0.0
        %417 = vmatpush1.msra.mxu0 0.0
        %418 = vmatprep.subr.mxu0 0.0
        %419 = vmatpush1.msra.mxu0 0.0
        %420 = vmatprep.subr.mxu0 0.0
        %421 = vmatpush1.msra.mxu0 0.0
        %422 = vmatprep.subr.mxu0 0.0
        %423 = vmatpush1.msra.mxu0 0.0
        %424 = vmatprep.mubr.f32.mxu0 0.0
        %425 = vmatmul.mubr.f32.gmra.mrb[0].mxu0 %v358
        %v426 = vpop.f32.mrb[0].mxu0
        %v427 = vadd.f32 0.0, %v426
        %v428 = vpop.f32.mrb[0].mxu0
        %v429 = vadd.f32 0.0, %v428
        %430 = vdwg.mxu0
        %431 = vmatprep.subr.mxu0 %v341
        %432 = vmatpush1.msra.mxu0 %v340
        %433 = vmatprep.subr.mxu0 %v343
        %434 = vmatpush1.msra.mxu0 %v342
        %435 = vmatprep.subr.mxu0 0.0
        %436 = vmatpush1.msra.mxu0 0.0
        %437 = vmatprep.subr.mxu0 0.0
        %438 = vmatpush1.msra.mxu0 0.0
        %439 = vmatprep.subr.mxu0 0.0
        %440 = vmatpush1.msra.mxu0 0.0
        %441 = vmatprep.subr.mxu0 0.0
        %442 = vmatpush1.msra.mxu0 0.0
        %443 = vmatprep.subr.mxu0 0.0
        %444 = vmatpush1.msra.mxu0 0.0
        %445 = vmatprep.subr.mxu0 0.0
        %446 = vmatpush1.msra.mxu0 0.0
        %447 = vmatprep.subr.mxu0 0.0
        %448 = vmatpush1.msra.mxu0 0.0
        %449 = vmatprep.subr.mxu0 0.0
        %450 = vmatpush1.msra.mxu0 0.0
        %451 = vmatprep.subr.mxu0 0.0
        %452 = vmatpush1.msra.mxu0 0.0
        %453 = vmatprep.subr.mxu0 0.0
        %454 = vmatpush1.msra.mxu0 0.0
        %455 = vmatprep.subr.mxu0 0.0
        %456 = vmatpush1.msra.mxu0 0.0
        %457 = vmatprep.subr.mxu0 0.0
        %458 = vmatpush1.msra.mxu0 0.0
        %459 = vmatprep.subr.mxu0 0.0
        %460 = vmatpush1.msra.mxu0 0.0
        %461 = vmatprep.subr.mxu0 0.0
        %462 = vmatpush1.msra.mxu0 0.0
        %463 = vmatprep.subr.mxu0 0.0
        %464 = vmatpush1.msra.mxu0 0.0
        %465 = vmatprep.subr.mxu0 0.0
        %466 = vmatpush1.msra.mxu0 0.0
        %467 = vmatprep.subr.mxu0 0.0
        %468 = vmatpush1.msra.mxu0 0.0
        %469 = vmatprep.subr.mxu0 0.0
        %470 = vmatpush1.msra.mxu0 0.0
        %471 = vmatprep.subr.mxu0 0.0
        %472 = vmatpush1.msra.mxu0 0.0
        %473 = vmatprep.subr.mxu0 0.0
        %474 = vmatpush1.msra.mxu0 0.0
        %475 = vmatprep.subr.mxu0 0.0
        %476 = vmatpush1.msra.mxu0 0.0
        %477 = vmatprep.subr.mxu0 0.0
        %478 = vmatpush1.msra.mxu0 0.0
        %479 = vmatprep.subr.mxu0 0.0
        %480 = vmatpush1.msra.mxu0 0.0
        %481 = vmatprep.subr.mxu0 0.0
        %482 = vmatpush1.msra.mxu0 0.0
        %483 = vmatprep.subr.mxu0 0.0
        %484 = vmatpush1.msra.mxu0 0.0
        %485 = vmatprep.subr.mxu0 0.0
        %486 = vmatpush1.msra.mxu0 0.0
        %487 = vmatprep.subr.mxu0 0.0
        %488 = vmatpush1.msra.mxu0 0.0
        %489 = vmatprep.subr.mxu0 0.0
        %490 = vmatpush1.msra.mxu0 0.0
        %491 = vmatprep.subr.mxu0 0.0
        %492 = vmatpush1.msra.mxu0 0.0
        %493 = vmatprep.subr.mxu0 0.0
        %494 = vmatpush1.msra.mxu0 0.0
        %495 = vmatprep.mubr.f32.mxu0 0.0
        %496 = vmatmul.mubr.f32.gmra.mrb[0].mxu0 %v358
        %v497 = vpop.f32.mrb[0].mxu0
        %v498 = vadd.f32 0.0, %v497
        %v499 = vpop.f32.mrb[0].mxu0
        %v500 = vadd.f32 0.0, %v499
        %501 = vdwg.mxu0
        %502 = vmatprep.subr.mxu0 %v345
        %503 = vmatpush1.msra.mxu0 %v344
        %504 = vmatprep.subr.mxu0 %v347
        %505 = vmatpush1.msra.mxu0 %v346
        %506 = vmatprep.subr.mxu0 0.0
        %507 = vmatpush1.msra.mxu0 0.0
        %508 = vmatprep.subr.mxu0 0.0
        %509 = vmatpush1.msra.mxu0 0.0
        %510 = vmatprep.subr.mxu0 0.0
        %511 = vmatpush1.msra.mxu0 0.0
        %512 = vmatprep.subr.mxu0 0.0
        %513 = vmatpush1.msra.mxu0 0.0
        %514 = vmatprep.subr.mxu0 0.0
        %515 = vmatpush1.msra.mxu0 0.0
        %516 = vmatprep.subr.mxu0 0.0
        %517 = vmatpush1.msra.mxu0 0.0
        %518 = vmatprep.subr.mxu0 0.0
        %519 = vmatpush1.msra.mxu0 0.0
        %520 = vmatprep.subr.mxu0 0.0
        %521 = vmatpush1.msra.mxu0 0.0
        %522 = vmatprep.subr.mxu0 0.0
        %523 = vmatpush1.msra.mxu0 0.0
        %524 = vmatprep.subr.mxu0 0.0
        %525 = vmatpush1.msra.mxu0 0.0
        %526 = vmatprep.subr.mxu0 0.0
        %527 = vmatpush1.msra.mxu0 0.0
        %528 = vmatprep.subr.mxu0 0.0
        %529 = vmatpush1.msra.mxu0 0.0
        %530 = vmatprep.subr.mxu0 0.0
        %531 = vmatpush1.msra.mxu0 0.0
        %532 = vmatprep.subr.mxu0 0.0
        %533 = vmatpush1.msra.mxu0 0.0
        %534 = vmatprep.subr.mxu0 0.0
        %535 = vmatpush1.msra.mxu0 0.0
        %536 = vmatprep.subr.mxu0 0.0
        %537 = vmatpush1.msra.mxu0 0.0
        %538 = vmatprep.subr.mxu0 0.0
        %539 = vmatpush1.msra.mxu0 0.0
        %540 = vmatprep.subr.mxu0 0.0
        %541 = vmatpush1.msra.mxu0 0.0
        %542 = vmatprep.subr.mxu0 0.0
        %543 = vmatpush1.msra.mxu0 0.0
        %544 = vmatprep.subr.mxu0 0.0
        %545 = vmatpush1.msra.mxu0 0.0
        %546 = vmatprep.subr.mxu0 0.0
        %547 = vmatpush1.msra.mxu0 0.0
        %548 = vmatprep.subr.mxu0 0.0
        %549 = vmatpush1.msra.mxu0 0.0
        %550 = vmatprep.subr.mxu0 0.0
        %551 = vmatpush1.msra.mxu0 0.0
        %552 = vmatprep.subr.mxu0 0.0
        %553 = vmatpush1.msra.mxu0 0.0
        %554 = vmatprep.subr.mxu0 0.0
        %555 = vmatpush1.msra.mxu0 0.0
        %556 = vmatprep.subr.mxu0 0.0
        %557 = vmatpush1.msra.mxu0 0.0
        %558 = vmatprep.subr.mxu0 0.0
        %559 = vmatpush1.msra.mxu0 0.0
        %560 = vmatprep.subr.mxu0 0.0
        %561 = vmatpush1.msra.mxu0 0.0
        %562 = vmatprep.subr.mxu0 0.0
        %563 = vmatpush1.msra.mxu0 0.0
        %564 = vmatprep.subr.mxu0 0.0
        %565 = vmatpush1.msra.mxu0 0.0
        %566 = vmatprep.mubr.f32.mxu0 0.0
        %567 = vmatmul.mubr.f32.gmra.mrb[0].mxu0 %v358
        %v568 = vpop.f32.mrb[0].mxu0
        %v569 = vadd.f32 0.0, %v568
        %v570 = vpop.f32.mrb[0].mxu0
        %v571 = vadd.f32 0.0, %v570
        %572 = vdwg.mxu0
        %573 = vmatprep.subr.mxu0 %v349
        %574 = vmatpush1.msra.mxu0 %v348
        %575 = vmatprep.subr.mxu0 %v351
        %576 = vmatpush1.msra.mxu0 %v350
        %577 = vmatprep.subr.mxu0 0.0
        %578 = vmatpush1.msra.mxu0 0.0
        %579 = vmatprep.subr.mxu0 0.0
        %580 = vmatpush1.msra.mxu0 0.0
        %581 = vmatprep.subr.mxu0 0.0
        %582 = vmatpush1.msra.mxu0 0.0
        %583 = vmatprep.subr.mxu0 0.0
        %584 = vmatpush1.msra.mxu0 0.0
        %585 = vmatprep.subr.mxu0 0.0
        %586 = vmatpush1.msra.mxu0 0.0
        %587 = vmatprep.subr.mxu0 0.0
        %588 = vmatpush1.msra.mxu0 0.0
        %589 = vmatprep.subr.mxu0 0.0
        %590 = vmatpush1.msra.mxu0 0.0
        %591 = vmatprep.subr.mxu0 0.0
        %592 = vmatpush1.msra.mxu0 0.0
        %593 = vmatprep.subr.mxu0 0.0
        %594 = vmatpush1.msra.mxu0 0.0
        %595 = vmatprep.subr.mxu0 0.0
        %596 = vmatpush1.msra.mxu0 0.0
        %597 = vmatprep.subr.mxu0 0.0
        %598 = vmatpush1.msra.mxu0 0.0
        %599 = vmatprep.subr.mxu0 0.0
        %600 = vmatpush1.msra.mxu0 0.0
        %601 = vmatprep.subr.mxu0 0.0
        %602 = vmatpush1.msra.mxu0 0.0
        %603 = vmatprep.subr.mxu0 0.0
        %604 = vmatpush1.msra.mxu0 0.0
        %605 = vmatprep.subr.mxu0 0.0
        %606 = vmatpush1.msra.mxu0 0.0
        %607 = vmatprep.subr.mxu0 0.0
        %608 = vmatpush1.msra.mxu0 0.0
        %609 = vmatprep.subr.mxu0 0.0
        %610 = vmatpush1.msra.mxu0 0.0
        %611 = vmatprep.subr.mxu0 0.0
        %612 = vmatpush1.msra.mxu0 0.0
        %613 = vmatprep.subr.mxu0 0.0
        %614 = vmatpush1.msra.mxu0 0.0
        %615 = vmatprep.subr.mxu0 0.0
        %616 = vmatpush1.msra.mxu0 0.0
        %617 = vmatprep.subr.mxu0 0.0
        %618 = vmatpush1.msra.mxu0 0.0
        %619 = vmatprep.subr.mxu0 0.0
        %620 = vmatpush1.msra.mxu0 0.0
        %621 = vmatprep.subr.mxu0 0.0
        %622 = vmatpush1.msra.mxu0 0.0
        %623 = vmatprep.subr.mxu0 0.0
        %624 = vmatpush1.msra.mxu0 0.0
        %625 = vmatprep.subr.mxu0 0.0
        %626 = vmatpush1.msra.mxu0 0.0
        %627 = vmatprep.subr.mxu0 0.0
        %628 = vmatpush1.msra.mxu0 0.0
        %629 = vmatprep.subr.mxu0 0.0
        %630 = vmatpush1.msra.mxu0 0.0
        %631 = vmatprep.subr.mxu0 0.0
        %632 = vmatpush1.msra.mxu0 0.0
        %633 = vmatprep.subr.mxu0 0.0
        %634 = vmatpush1.msra.mxu0 0.0
        %635 = vmatprep.subr.mxu0 0.0
        %636 = vmatpush1.msra.mxu0 0.0
        %637 = vmatprep.mubr.f32.mxu0 0.0
        %638 = vmatmul.mubr.f32.gmra.mrb[0].mxu0 %v358
        %v639 = vpop.f32.mrb[0].mxu0
        %v640 = vadd.f32 0.0, %v639
        %v641 = vpop.f32.mrb[0].mxu0
        %v642 = vadd.f32 0.0, %v641
        %643 = vdwg.mxu0
        %644 = vmatprep.subr.mxu0 %v353
        %645 = vmatpush1.msra.mxu0 %v352
        %646 = vmatprep.subr.mxu0 %v355
        %647 = vmatpush1.msra.mxu0 %v354
        %648 = vmatprep.subr.mxu0 0.0
        %649 = vmatpush1.msra.mxu0 0.0
        %650 = vmatprep.subr.mxu0 0.0
        %651 = vmatpush1.msra.mxu0 0.0
        %652 = vmatprep.subr.mxu0 0.0
        %653 = vmatpush1.msra.mxu0 0.0
        %654 = vmatprep.subr.mxu0 0.0
        %655 = vmatpush1.msra.mxu0 0.0
        %656 = vmatprep.subr.mxu0 0.0
        %657 = vmatpush1.msra.mxu0 0.0
        %658 = vmatprep.subr.mxu0 0.0
        %659 = vmatpush1.msra.mxu0 0.0
        %660 = vmatprep.subr.mxu0 0.0
        %661 = vmatpush1.msra.mxu0 0.0
        %662 = vmatprep.subr.mxu0 0.0
        %663 = vmatpush1.msra.mxu0 0.0
        %664 = vmatprep.subr.mxu0 0.0
        %665 = vmatpush1.msra.mxu0 0.0
        %666 = vmatprep.subr.mxu0 0.0
        %667 = vmatpush1.msra.mxu0 0.0
        %668 = vmatprep.subr.mxu0 0.0
        %669 = vmatpush1.msra.mxu0 0.0
        %670 = vmatprep.subr.mxu0 0.0
        %671 = vmatpush1.msra.mxu0 0.0
        %672 = vmatprep.subr.mxu0 0.0
        %673 = vmatpush1.msra.mxu0 0.0
        %674 = vmatprep.subr.mxu0 0.0
        %675 = vmatpush1.msra.mxu0 0.0
        %676 = vmatprep.subr.mxu0 0.0
        %677 = vmatpush1.msra.mxu0 0.0
        %678 = vmatprep.subr.mxu0 0.0
        %679 = vmatpush1.msra.mxu0 0.0
        %680 = vmatprep.subr.mxu0 0.0
        %681 = vmatpush1.msra.mxu0 0.0
        %682 = vmatprep.subr.mxu0 0.0
        %683 = vmatpush1.msra.mxu0 0.0
        %684 = vmatprep.subr.mxu0 0.0
        %685 = vmatpush1.msra.mxu0 0.0
        %686 = vmatprep.subr.mxu0 0.0
        %687 = vmatpush1.msra.mxu0 0.0
        %688 = vmatprep.subr.mxu0 0.0
        %689 = vmatpush1.msra.mxu0 0.0
        %690 = vmatprep.subr.mxu0 0.0
        %691 = vmatpush1.msra.mxu0 0.0
        %692 = vmatprep.subr.mxu0 0.0
        %693 = vmatpush1.msra.mxu0 0.0
        %694 = vmatprep.subr.mxu0 0.0
        %695 = vmatpush1.msra.mxu0 0.0
        %696 = vmatprep.subr.mxu0 0.0
        %697 = vmatpush1.msra.mxu0 0.0
        %698 = vmatprep.subr.mxu0 0.0
        %699 = vmatpush1.msra.mxu0 0.0
        %700 = vmatprep.subr.mxu0 0.0
        %701 = vmatpush1.msra.mxu0 0.0
        %702 = vmatprep.subr.mxu0 0.0
        %703 = vmatpush1.msra.mxu0 0.0
        %704 = vmatprep.subr.mxu0 0.0
        %705 = vmatpush1.msra.mxu0 0.0
        %706 = vmatprep.subr.mxu0 0.0
        %707 = vmatpush1.msra.mxu0 0.0
        %708 = vmatprep.mubr.f32.mxu0 0.0
        %709 = vmatmul.mubr.f32.gmra.mrb[0].mxu0 %v358
        %v710 = vpop.f32.mrb[0].mxu0
        %v711 = vadd.f32 0.0, %v710
        %v712 = vpop.f32.mrb[0].mxu0
        %v713 = vadd.f32 0.0, %v712
        %714 = vdwg.mxu0
        %715 = vmatprep.subr.mxu0 0.0
        %716 = vmatpush1.msra.mxu0 %v284
        %717 = vmatprep.subr.mxu0 0.0
        %718 = vmatpush1.msra.mxu0 %v285
        %719 = vmatprep.subr.mxu0 0.0
        %720 = vmatpush1.msra.mxu0 %v286
        %721 = vmatprep.subr.mxu0 0.0
        %722 = vmatpush1.msra.mxu0 %v287
        %723 = vmatprep.subr.mxu0 0.0
        %724 = vmatpush1.msra.mxu0 %v288
        %725 = vmatprep.subr.mxu0 0.0
        %726 = vmatpush1.msra.mxu0 %v289
        %727 = vmatprep.subr.mxu0 0.0
        %728 = vmatpush1.msra.mxu0 %v290
        %729 = vmatprep.subr.mxu0 0.0
        %730 = vmatpush1.msra.mxu0 %v291
        %731 = vmatprep.subr.mxu0 0.0
        %732 = vmatpush1.msra.mxu0 %v292
        %733 = vmatprep.subr.mxu0 0.0
        %734 = vmatpush1.msra.mxu0 %v293
        %735 = vmatprep.subr.mxu0 0.0
        %736 = vmatpush1.msra.mxu0 %v294
        %737 = vmatprep.subr.mxu0 0.0
        %738 = vmatpush1.msra.mxu0 %v295
        %739 = vmatprep.subr.mxu0 0.0
        %740 = vmatpush1.msra.mxu0 %v296
        %741 = vmatprep.subr.mxu0 0.0
        %742 = vmatpush1.msra.mxu0 %v297
        %743 = vmatprep.subr.mxu0 0.0
        %744 = vmatpush1.msra.mxu0 %v298
        %745 = vmatprep.subr.mxu0 0.0
        %746 = vmatpush1.msra.mxu0 %v299
        %747 = vmatprep.subr.mxu0 0.0
        %748 = vmatpush1.msra.mxu0 %v300
        %749 = vmatprep.subr.mxu0 0.0
        %750 = vmatpush1.msra.mxu0 %v301
        %751 = vmatprep.subr.mxu0 0.0
        %752 = vmatpush1.msra.mxu0 %v302
        %753 = vmatprep.subr.mxu0 0.0
        %754 = vmatpush1.msra.mxu0 %v303
        %755 = vmatprep.subr.mxu0 0.0
        %756 = vmatpush1.msra.mxu0 %v304
        %757 = vmatprep.subr.mxu0 0.0
        %758 = vmatpush1.msra.mxu0 %v305
        %759 = vmatprep.subr.mxu0 0.0
        %760 = vmatpush1.msra.mxu0 %v306
        %761 = vmatprep.subr.mxu0 0.0
        %762 = vmatpush1.msra.mxu0 %v307
        %763 = vmatprep.subr.mxu0 0.0
        %764 = vmatpush1.msra.mxu0 %v308
        %765 = vmatprep.subr.mxu0 0.0
        %766 = vmatpush1.msra.mxu0 %v309
        %767 = vmatprep.subr.mxu0 0.0
        %768 = vmatpush1.msra.mxu0 %v310
        %769 = vmatprep.subr.mxu0 0.0
        %770 = vmatpush1.msra.mxu0 %v311
        %771 = vmatprep.subr.mxu0 0.0
        %772 = vmatpush1.msra.mxu0 %v312
        %773 = vmatprep.subr.mxu0 0.0
        %774 = vmatpush1.msra.mxu0 %v313
        %775 = vmatprep.subr.mxu0 0.0
        %776 = vmatpush1.msra.mxu0 %v314
        %777 = vmatprep.subr.mxu0 0.0
        %778 = vmatpush1.msra.mxu0 %v315
        %779 = vmatprep.mubr.f32.mxu0 %v429
        %780 = vmatmul.mubr.f32.gmra.mrb[0].mxu0 %v427
        %v781 = vpop.f32.mrb[0].mxu0
        %v782 = vadd.f32 0.0, %v781
        %v783 = vpop.f32.mrb[0].mxu0
        %784 = vmatprep.mubr.f32.mxu0 %v500
        %785 = vmatmul.mubr.f32.gmra.mrb[0].mxu0 %v498
        %v786 = vpop.f32.mrb[0].mxu0
        %v787 = vadd.f32 0.0, %v786
        %v788 = vpop.f32.mrb[0].mxu0
        %789 = vmatprep.mubr.f32.mxu0 %v571
        %790 = vmatmul.mubr.f32.gmra.mrb[0].mxu0 %v569
        %v791 = vpop.f32.mrb[0].mxu0
        %v792 = vadd.f32 0.0, %v791
        %v793 = vpop.f32.mrb[0].mxu0
        %794 = vmatprep.mubr.f32.mxu0 %v642
        %795 = vmatmul.mubr.f32.gmra.mrb[0].mxu0 %v640
        %v796 = vpop.f32.mrb[0].mxu0
        %v797 = vadd.f32 0.0, %v796
        %v798 = vpop.f32.mrb[0].mxu0
        %799 = vmatprep.mubr.f32.mxu0 %v713
        %800 = vmatmul.mubr.f32.gmra.mrb[0].mxu0 %v711
        %v801 = vpop.f32.mrb[0].mxu0
        %v802 = vadd.f32 0.0, %v801
        %v803 = vpop.f32.mrb[0].mxu0
        %804 = vdwg.mxu0
        %v805 = vmul.f32 %v782, %v782
        %v806 = vmul.f32 %v787, %v787
        %v807 = vmul.f32 %v782, %v787
        %v808 = vsub.f32 %v792, %v805
        %v809 = vsub.f32 %v797, %v806
        %v810 = vsub.f32 %v802, %v807
        %v811 = vmul.f32 %v807, 2.0
        %v812 = vadd.f32 %v811, 6.5025
        %v813 = vmul.f32 %v810, 2.0
        %v814 = vadd.f32 %v813, 58.5225
        %v815 = vmax.f32 %v814, 0.0
        %v816 = vmul.f32 %v812, %v815
        %v817 = vadd.f32 %v805, %v806
        %v818 = vadd.f32 %v817, 6.5025
        %v819 = vadd.f32 %v808, %v809
        %v820 = vadd.f32 %v819, 58.5225
        %v821 = vmul.f32 %v818, %v820
        %v822 = vrcp.pop %v821
        %v823 = vmul.f32 %v816, %v822
        %vm824 = vcmp.lt.s32.totalorder %v317, 6
        %vm825 = vcmp.lt.s32.totalorder %v319, 6
        %vm826 = vmand %vm824, %vm825
        %v827 = vsel %vm826, %v823, 0.0
        %828 = vadd.xlane.f32.xlu0 %v827
        %v829 = vpop.xlane.xlu0 %828
        %v830 = vrot.slane %v829, 4
        %v831 = vadd.f32 %v829, %v830
        %v832 = vrot.slane %v831, 2
        %v833 = vadd.f32 %v831, %v832
        %v834 = vrot.slane %v833, 1
        %v835 = vadd.f32 %v833, %v834
        %v836 = vadd.f32 %v835, 0.0
        %v837 = vmul.f32 %v836, 0.027777778
        %838 = vst [vmem:[%s282] sm:$0xff] %v837
        %s839 = sand.u32 %s127, 1
        %s840 = scalar_lea.sflag [#allocation4], %s839
        %s841 = sand.u32 %s127, 1
        %s842 = smul.addr %s841, 8
        %s843 = scalar_lea.vmem [#allocation10], %s842
        // Predicated region
        $region53: #{tpu_custom_call.1} parent=35 // pred_check
          %p844 = pneg %p137
        $region54: #{tpu_custom_call.1} parent=35 // pred_check_branch
          %846 = sbr.rel (%p844) target = $region56
        $region55: #{tpu_custom_call.1} parent=35 // pred_region
          %s848 = ssub.s32 128, 128
          %849 = vsyncadd %s840, %s848
          %s850 = smul.addr %s25, 128
          %s851 = scalar_lea.hbm %s4, %s850
          %s853 = sshll.u32 %s843, 4
          %s854 = int_to_ptr.vmem [resolvable:$true] %s853
          %856 = dma.vmem_to_hbm [thread:$0]  %s854, 128, %s851, %s840
        $region56: #{tpu_custom_call.1} parent=35 // pred_fallthru
          _
      $region36: #{tpu_custom_call.1} parent=5 // pred_fallthru
        _
      %p857 = scmp.le.s32.totalorder 2, %s20
      // Predicated region
      $region57: #{tpu_custom_call.1} parent=5 // pred_check
        %p858 = pneg %p857
      $region58: #{tpu_custom_call.1} parent=5 // pred_check_branch
        %860 = sbr.rel (%p858) target = $region60
      $region59: #{tpu_custom_call.1} parent=5 // pred_region
        %s861 = ssub.s32 %s20, 2
        // Predicated region
        $region61: #{tpu_custom_call.1} parent=59 // pred_check
          %p862 = pneg %p143
        $region62: #{tpu_custom_call.1} parent=59 // pred_check_branch
          %864 = sbr.rel (%p862) target = $region64
        $region63: #{tpu_custom_call.1} parent=59 // pred_region
          %s865 = sand.u32 %s128, 1
          %s866 = scalar_lea.sflag [#allocation4], %s865
          %s867 = sand.u32 %s128, 1
          %s868 = smul.addr %s867, 8
          %s869 = scalar_lea.vmem [#allocation10], %s868
          %870 = dma.done %s866, 128
        $region64: #{tpu_custom_call.1} parent=59 // pred_fallthru
          _
      $region60: #{tpu_custom_call.1} parent=5 // pred_fallthru
        _
    $region6: #{tpu_custom_call.1} parent=1 // loop_footer
      %s24 = sadd.s32 1, %s20
    $region7: #{tpu_custom_call.1} parent=1 // loop_footer_branch
      %19 = sbr.rel target = $region3
    $region8: #{tpu_custom_call.1} parent=1 // loop_exit
      _
    %871 = vsyncpa [#allocation3], 1
    %s872 = scalar_lea.sflag [#allocation3], 1
    %873 = vsyncpa %s872, 1
    %874 = vsyncpa [#allocation6], 1
    %s875 = scalar_lea.sflag [#allocation6], 1
    %876 = vsyncpa %s875, 1
    %877 = vsyncpa [#allocation9], 1
    %878 = vsyncpa [#allocation4], 1
    %s879 = scalar_lea.sflag [#allocation4], 1
    %880 = vsyncpa %s879, 1

</llo_original>
